<compile_context>
chip_gen: v6e
topology: v6e:2x2x1
jax: 0.10.0
libtpu: 0.0.40
codegen_flags: <defaults>
</compile_context>

<pallas_src>
import functools
import math

import jax
import jax.numpy as jnp
from jax import lax
from jax.experimental import pallas as pl
from jax.experimental.pallas import tpu as pltpu


def _ifgo_to_ifog(w, H):
    """Reorder a trailing 4H gate axis from PyTorch's [i, f, g, o] to [i, f, o, g]."""
    return jnp.concatenate(
        [w[..., :2 * H], w[..., 3 * H:4 * H], w[..., 2 * H:3 * H]], axis=-1)


def _lstm_cell(g, h_prev, c_prev, valid_col, H):
    """One LSTM cell update; gate columns ordered [i, f, o, g] (sigmoid block first)."""
    sig = jax.nn.sigmoid(g[:, :3 * H])          # one contiguous 3H EUP slab (i, f, o)
    gg = jnp.tanh(g[:, 3 * H:])                 # g gate
    i = sig[:, :H]
    f = sig[:, H:2 * H]
    o = sig[:, 2 * H:3 * H]
    c_new = f * c_prev + i * gg
    h_new = o * jnp.tanh(c_new)
    valid = jnp.broadcast_to(valid_col, h_new.shape)   # broadcast once, reuse for h & c
    return jnp.where(valid, h_new, h_prev), jnp.where(valid, c_new, c_prev)


def _bilstm_kernel(len_ref, x_ref, w_in_ref, b_ref, w_hh_ref, out_ref, gx_ref, *, T, H):
    TB = out_ref.shape[0]
    E = x_ref.shape[-1]

    # ---- Phase 1: hoisted input projection (both directions, one MXU matmul). ----
    # (T*TB, E) @ (E, 8H): bf16 inputs, f32 accumulation, bias folded in once;
    # stored to a bf16 VMEM scratch (halves the dominant VMEM allocation).
    x = x_ref[...]                                            # (T, TB, E) bf16
    gx = jnp.dot(x.reshape(T * TB, E), w_in_ref[...],
                 preferred_element_type=jnp.float32)          # (T*TB, 8H) f32
    gx = gx + b_ref[...]
    gx_ref[...] = gx.reshape(T, TB, 8 * H).astype(jnp.bfloat16)

    lengths = len_ref[...]                                    # (TB, 1) int32
    w_hh = w_hh_ref[...]                                      # (2H, 4H) bf16, resident
    w_hh_f = w_hh[:H]
    w_hh_b = w_hh[H:]

    # ---- Phase 2: fused fwd/bwd recurrence. ----
    # Per step: two independent per-direction (TB,H)@(H,4H) recurrent matmuls,
    # each paired with ONE contiguous (TB, 4H) load of its half of gx.
    def step(k, carry):
        h_f, c_f, h_b, c_b = carry                            # each (TB, H) f32
        t_b = T - 1 - k
        g_f = jnp.dot(h_f.astype(jnp.bfloat16), w_hh_f,
                      preferred_element_type=jnp.float32)
        g_f = g_f + gx_ref[k, :, :4 * H].astype(jnp.float32)
        g_b = jnp.dot(h_b.astype(jnp.bfloat16), w_hh_b,
                      preferred_element_type=jnp.float32)
        g_b = g_b + gx_ref[t_b, :, 4 * H:].astype(jnp.float32)
        h_f, c_f = _lstm_cell(g_f, h_f, c_f, k < lengths, H)
        h_b, c_b = _lstm_cell(g_b, h_b, c_b, t_b < lengths, H)
        return h_f, c_f, h_b, c_b

    zeros = jnp.zeros((TB, H), jnp.float32)
    h_f, _, h_b, _ = lax.fori_loop(0, T, step, (zeros, zeros, zeros, zeros),
                                   unroll=min(T, 8))

    # Single lane-dense (TB, 2H) output store; one concat total (not per step).
    out_ref[...] = jnp.concatenate([h_f, h_b], axis=1)


def _pick_batch_tile(B, T, H, E):
    """Pick the batch tile (power of two, >=8, <=512) from a generation-aware VMEM budget."""
    try:
        vmem_cap = int(pltpu.get_tpu_info().vmem_capacity_bytes)
    except Exception:
        vmem_cap = 64 * 1024 * 1024          # conservative default (v7x: 64 MiB/core)
    # Per batch row resident in VMEM: bf16 gx scratch (T, 8H), double-buffered
    # bf16 x block (T, E), double-buffered f32 output row (2H), int32 length.
    per_row = T * 8 * H * 2 + 2 * T * E * 2 + 2 * 2 * H * 4 + 8
    budget = max(vmem_cap // 3, 1 << 20)
    cap = max(8, budget // max(per_row, 1))
    tb = 8
    while tb * 2 <= min(cap, 512):
        tb *= 2
    # Prefer >=2 grid steps so the "parallel" batch axis can shard across the two
    # TensorCores on v7x (an extra ~0.35us grid step is noise on 1-TC chips).
    while tb > 8 and tb >= max(B, 1):
        tb //= 2
    vmem_limit = int(min(vmem_cap, max(2 * tb * per_row + (4 << 20), 32 << 20)))
    return tb, vmem_limit


def node_encoder_forward(node_embed, node_lengths, params, cfg):
    T = cfg["max_path_nodes"]
    E = cfg["node_embedding_dim"]
    H = cfg["encoder_hidden_dim"]
    C = cfg["max_contexts"]

    x = jnp.reshape(node_embed, (-1, T, E))
    lengths = jnp.reshape(node_lengths, (-1,)).astype(jnp.int32)
    B = x.shape[0]

    TB, vmem_limit = _pick_batch_tile(B, T, H, E)
    n_tiles = pl.cdiv(B, TB)
    B_pad = n_tiles * TB
    if B_pad != B:
        # Padded rows get length 0 -> both directions keep the zero init; rows are
        # sliced off below.  (Replaces the old whole-batch-in-VMEM fallback.)
        x = jnp.pad(x, ((0, B_pad - B), (0, 0), (0, 0)))
        lengths = jnp.pad(lengths, (0, B_pad - B))

    x_tm = jnp.transpose(x, (1, 0, 2)).astype(jnp.bfloat16)   # (T, B_pad, E) time-major
    len2d = lengths[:, None]                                  # (B_pad, 1)

    # Fused weights.  Per-direction gate columns reordered [i,f,g,o] -> [i,f,o,g]
    # so the kernel applies one sigmoid over a contiguous 3H slab per direction.
    w_in = jnp.concatenate([_ifgo_to_ifog(params["wih_f"], H),
                            _ifgo_to_ifog(params["wih_b"], H)],
                           axis=1).astype(jnp.bfloat16)       # (E, 8H)
    b_cat = jnp.concatenate([_ifgo_to_ifog(params["b_f"], H),
                             _ifgo_to_ifog(params["b_b"], H)],
                            axis=1).astype(jnp.float32)       # (1, 8H)
    w_hh = jnp.concatenate([_ifgo_to_ifog(params["whh_f"], H),
                            _ifgo_to_ifog(params["whh_b"], H)],
                           axis=0).astype(jnp.bfloat16)       # (2H, 4H) row-stacked

    grid = (B_pad // TB,)
    kernel = functools.partial(_bilstm_kernel, T=T, H=H)
    h_cat = pl.pallas_call(
        kernel,
        out_shape=jax.ShapeDtypeStruct((B_pad, 2 * H), jnp.float32),
        grid=grid,
        in_specs=[
            pl.BlockSpec((TB, 1), lambda i: (i, 0)),          # lengths
            pl.BlockSpec((T, TB, E), lambda i: (0, i, 0)),    # x (time-major)
            pl.BlockSpec((E, 8 * H), lambda i: (0, 0)),       # W_in  (resident)
            pl.BlockSpec((1, 8 * H), lambda i: (0, 0)),       # bias  (resident)
            pl.BlockSpec((2 * H, 4 * H), lambda i: (0, 0)),   # W_hh  (resident)
        ],
        out_specs=pl.BlockSpec((TB, 2 * H), lambda i: (i, 0)),
        scratch_shapes=[pltpu.VMEM((T, TB, 8 * H), jnp.bfloat16)],
        compiler_params=pltpu.CompilerParams(
            dimension_semantics=("parallel",),                # megacore on v7x
            vmem_limit_bytes=vmem_limit,
        ),
    )(len2d, x_tm, w_in, b_cat, w_hh)

    h_cat = h_cat[:B]
    # nn.LSTM(bidirectional=True) hidden[0] is (2, B, H); the module then does a
    # raw reshape to (-1, C, 2H) (dir-major flatten) -- reproduced exactly.
    h_n = jnp.stack([h_cat[:, :H], h_cat[:, H:]], axis=0)     # (2, B, H)
    return jnp.reshape(h_n, (-1, C, 2 * H))


def init_lstm_params(key, E, H):
    k = 1.0 / math.sqrt(H)
    ks = jax.random.split(key, 8)
    u = lambda kk, shape: jax.random.uniform(kk, shape, jnp.float32, -k, k)
    w_ih_f, w_hh_f = u(ks[0], (4 * H, E)), u(ks[1], (4 * H, H))
    b_ih_f, b_hh_f = u(ks[2], (4 * H,)), u(ks[3], (4 * H,))
    w_ih_b, w_hh_b = u(ks[4], (4 * H, E)), u(ks[5], (4 * H, H))
    b_ih_b, b_hh_b = u(ks[6], (4 * H,)), u(ks[7], (4 * H,))
    return {
        "wih_f": w_ih_f.T, "whh_f": w_hh_f.T, "b_f": (b_ih_f + b_hh_f)[None, :],
        "wih_b": w_ih_b.T, "whh_b": w_hh_b.T, "b_b": (b_ih_b + b_hh_b)[None, :],
    }


def _reference(node_embed, node_lengths, params, cfg):
    # Pure-JAX reference (masked bidirectional LSTM == packed-sequence LSTM),
    # using the same bf16-matmul / f32-accumulate precision as the kernel.
    T, E = cfg["max_path_nodes"], cfg["node_embedding_dim"]
    H, C = cfg["encoder_hidden_dim"], cfg["max_contexts"]
    x = jnp.reshape(node_embed, (-1, T, E)).astype(jnp.float32)
    lengths = jnp.reshape(node_lengths, (-1,)).astype(jnp.int32)
    B = x.shape[0]

    def run(wih, whh, b, reverse):
        wih = wih.astype(jnp.bfloat16)
        whh = whh.astype(jnp.bfloat16)

        def cell(carry, inp):
            h, c = carry
            x_t, t = inp
            g = (jnp.dot(x_t.astype(jnp.bfloat16), wih,
                         preferred_element_type=jnp.float32)
                 + jnp.dot(h.astype(jnp.bfloat16), whh,
                           preferred_element_type=jnp.float32)
                 + b)
            i = jax.nn.sigmoid(g[:, :H]); f = jax.nn.sigmoid(g[:, H:2 * H])
            gg = jnp.tanh(g[:, 2 * H:3 * H]); o = jax.nn.sigmoid(g[:, 3 * H:])
            c_n = f * c + i * gg
            h_n = o * jnp.tanh(c_n)
            valid = (t < lengths)[:, None]
            return (jnp.where(valid, h_n, h), jnp.where(valid, c_n, c)), None

        ts = jnp.arange(T)
        xs = jnp.transpose(x, (1, 0, 2))
        if reverse:
            ts, xs = ts[::-1], xs[::-1]
        (h, _), _ = lax.scan(cell, (jnp.zeros((B, H), jnp.float32),
                                    jnp.zeros((B, H), jnp.float32)), (xs, ts))
        return h

    h_f = run(params["wih_f"], params["whh_f"], params["b_f"], False)
    h_b = run(params["wih_b"], params["whh_b"], params["b_b"], True)
    return jnp.reshape(jnp.stack([h_f, h_b], 0), (-1, C, 2 * H))


if __name__ == "__main__":
    cfg = dict(node_embedding_dim=16, encoder_hidden_dim=32,
               max_path_nodes=8, max_contexts=4, dropout_rate=0.0)
    batch = 2

    key = jax.random.PRNGKey(0)
    k_embed, k_len, k_params = jax.random.split(key, 3)

    node_embed = jax.random.normal(
        k_embed,
        (batch, cfg["max_contexts"], cfg["max_path_nodes"], cfg["node_embedding_dim"]),
        jnp.float32)
    node_lengths = jax.random.randint(
        k_len, (batch, cfg["max_contexts"]), 1, cfg["max_path_nodes"] + 1, jnp.int32)

    params = init_lstm_params(k_params, cfg["node_embedding_dim"],
                              cfg["encoder_hidden_dim"])

    out = jax.block_until_ready(
        node_encoder_forward(node_embed, node_lengths, params, cfg))
    ref = jax.block_until_ready(
        _reference(node_embed, node_lengths, params, cfg))

    assert out.shape == (batch, cfg["max_contexts"], 2 * cfg["encoder_hidden_dim"])
    # bf16 matmul precision in both kernel and reference (plus bf16 gx storage in
    # the kernel); tolerance sized for that.
    assert jnp.allclose(out, ref, atol=2e-2, rtol=2e-2), \
        float(jnp.max(jnp.abs(out - ref)))

    print("KERNEL_OK")
</pallas_src>

<mosaic_0001>
module attributes {stable_mosaic.version = 11 : i64} {
  func.func @_bilstm_kernel(%arg0: i32, %arg1: memref<8x1xi32, #tpu.memory_space<vmem>>, %arg2: memref<8x8x16xbf16, #tpu.memory_space<vmem>>, %arg3: memref<16x256xbf16, #tpu.memory_space<vmem>>, %arg4: memref<1x256xf32, #tpu.memory_space<vmem>>, %arg5: memref<64x128xbf16, #tpu.memory_space<vmem>>, %arg6: memref<8x64xf32, #tpu.memory_space<vmem>>, %arg7: memref<8x8x256xbf16, #tpu.memory_space<vmem>>) attributes {dimension_semantics = [#tpu.dimension_semantics<parallel>], iteration_bounds = array<i64: 1>, scalar_prefetch = 0 : i64, scratch_operands = 1 : i64, tpu.core_type = #tpu.core_type<tc>, window_params = [{transform_indices = @transform_0, window_bounds = array<i64: 8, 1>}, {transform_indices = @transform_1, window_bounds = array<i64: 8, 8, 16>}, {pipeline_mode = #tpu.pipeline_mode<synchronous>, transform_indices = @transform_2, window_bounds = array<i64: 16, 256>}, {pipeline_mode = #tpu.pipeline_mode<synchronous>, transform_indices = @transform_3, window_bounds = array<i64: 1, 256>}, {pipeline_mode = #tpu.pipeline_mode<synchronous>, transform_indices = @transform_4, window_bounds = array<i64: 64, 128>}, {transform_indices = @transform_5, window_bounds = array<i64: 8, 64>}]} {
    %c0 = arith.constant 0 : index
    %c0_0 = arith.constant 0 : index
    %c0_1 = arith.constant 0 : index
    %0 = vector.load %arg2[%c0, %c0_0, %c0_1] : memref<8x8x16xbf16, #tpu.memory_space<vmem>>, vector<8x8x16xbf16>
    %1 = vector.shape_cast %0 : vector<8x8x16xbf16> to vector<64x16xbf16>
    %c0_2 = arith.constant 0 : index
    %c0_3 = arith.constant 0 : index
    %2 = vector.load %arg3[%c0_2, %c0_3] : memref<16x256xbf16, #tpu.memory_space<vmem>>, vector<16x256xbf16>
    %cst = arith.constant dense<0.000000e+00> : vector<64x256xf32>
    %3 = tpu.matmul %1, %2, %cst {dimension_numbers = #tpu.dot_dimension_numbers<[1], [0], [0], [1], [0, 0, 1, 1], [], []>} : vector<64x16xbf16>, vector<16x256xbf16>, vector<64x256xf32> -> vector<64x256xf32>
    %c0_4 = arith.constant 0 : index
    %c0_5 = arith.constant 0 : index
    %4 = vector.load %arg4[%c0_4, %c0_5] : memref<1x256xf32, #tpu.memory_space<vmem>>, vector<1x256xf32>
    %5 = vector.broadcast %4 : vector<1x256xf32> to vector<64x256xf32>
    %6 = arith.addf %3, %5 : vector<64x256xf32>
    %7 = vector.shape_cast %6 : vector<64x256xf32> to vector<8x8x256xf32>
    %8 = arith.truncf %7 : vector<8x8x256xf32> to vector<8x8x256xbf16>
    %c0_6 = arith.constant 0 : index
    %c0_7 = arith.constant 0 : index
    %c0_8 = arith.constant 0 : index
    %9 = vector.load %arg7[%c0_6, %c0_7, %c0_8] : memref<8x8x256xbf16, #tpu.memory_space<vmem>>, vector<8x8x256xbf16>
    tpu.vector_store %arg7[%c0_6, %c0_7, %c0_8], %8 {strides = array<i32>} : memref<8x8x256xbf16, #tpu.memory_space<vmem>>, vector<8x8x256xbf16>,
    %c0_9 = arith.constant 0 : index
    %c0_10 = arith.constant 0 : index
    %10 = vector.load %arg1[%c0_9, %c0_10] : memref<8x1xi32, #tpu.memory_space<vmem>>, vector<8x1xi32>
    %c0_11 = arith.constant 0 : index
    %c0_12 = arith.constant 0 : index
    %11 = vector.load %arg5[%c0_11, %c0_12] : memref<64x128xbf16, #tpu.memory_space<vmem>>, vector<64x128xbf16>
    %12 = vector.extract_strided_slice %11 {offsets = [0, 0], sizes = [32, 128], strides = [1, 1]} : vector<64x128xbf16> to vector<32x128xbf16>
    %13 = vector.extract_strided_slice %11 {offsets = [32, 0], sizes = [32, 128], strides = [1, 1]} : vector<64x128xbf16> to vector<32x128xbf16>
    %cst_13 = arith.constant 0.000000e+00 : f32
    %14 = vector.broadcast %cst_13 : f32 to vector<8x32xf32>
    %c0_i32 = arith.constant 0 : i32
    %c7_i32 = arith.constant 7 : i32
    %15 = arith.subi %c7_i32, %c0_i32 : i32
    %16 = arith.truncf %14 : vector<8x32xf32> to vector<8x32xbf16>
    %cst_14 = arith.constant dense<0.000000e+00> : vector<8x128xf32>
    %17 = tpu.matmul %16, %12, %cst_14 {dimension_numbers = #tpu.dot_dimension_numbers<[1], [0], [0], [1], [0, 0, 1, 1], [], []>} : vector<8x32xbf16>, vector<32x128xbf16>, vector<8x128xf32> -> vector<8x128xf32>
    %18 = arith.index_cast %c0_i32 : i32 to index
    %c0_15 = arith.constant 0 : index
    %c0_16 = arith.constant 0 : index
    %19 = vector.load %arg7[%18, %c0_15, %c0_16] : memref<8x8x256xbf16, #tpu.memory_space<vmem>>, vector<1x8x128xbf16>
    %20 = vector.shape_cast %19 : vector<1x8x128xbf16> to vector<8x128xbf16>
    %21 = arith.extf %20 : vector<8x128xbf16> to vector<8x128xf32>
    %22 = arith.addf %17, %21 : vector<8x128xf32>
    %23 = arith.truncf %14 : vector<8x32xf32> to vector<8x32xbf16>
    %cst_17 = arith.constant dense<0.000000e+00> : vector<8x128xf32>
    %24 = tpu.matmul %23, %13, %cst_17 {dimension_numbers = #tpu.dot_dimension_numbers<[1], [0], [0], [1], [0, 0, 1, 1], [], []>} : vector<8x32xbf16>, vector<32x128xbf16>, vector<8x128xf32> -> vector<8x128xf32>
    %25 = arith.index_cast %15 : i32 to index
    %c0_18 = arith.constant 0 : index
    %c128 = arith.constant 128 : index
    %26 = vector.load %arg7[%25, %c0_18, %c128] : memref<8x8x256xbf16, #tpu.memory_space<vmem>>, vector<1x8x128xbf16>
    %27 = vector.shape_cast %26 : vector<1x8x128xbf16> to vector<8x128xbf16>
    %28 = arith.extf %27 : vector<8x128xbf16> to vector<8x128xf32>
    %29 = arith.addf %24, %28 : vector<8x128xf32>
    %30 = vector.broadcast %c0_i32 : i32 to vector<8x1xi32>
    %31 = arith.cmpi slt, %30, %10 : vector<8x1xi32>
    %32 = vector.extract_strided_slice %22 {offsets = [0, 0], sizes = [8, 96], strides = [1, 1]} : vector<8x128xf32> to vector<8x96xf32>
    %33 = arith.negf %32 : vector<8x96xf32>
    %34 = math.exp %33 : vector<8x96xf32>
    %cst_19 = arith.constant 1.000000e+00 : f32
    %35 = vector.broadcast %cst_19 : f32 to vector<8x96xf32>
    %36 = arith.addf %35, %34 : vector<8x96xf32>
    %37 = arith.divf %35, %36 : vector<8x96xf32>
    %38 = vector.extract_strided_slice %22 {offsets = [0, 96], sizes = [8, 32], strides = [1, 1]} : vector<8x128xf32> to vector<8x32xf32>
    %39 = math.tanh %38 : vector<8x32xf32>
    %40 = vector.extract_strided_slice %37 {offsets = [0, 0], sizes = [8, 32], strides = [1, 1]} : vector<8x96xf32> to vector<8x32xf32>
    %41 = vector.extract_strided_slice %37 {offsets = [0, 32], sizes = [8, 32], strides = [1, 1]} : vector<8x96xf32> to vector<8x32xf32>
    %42 = vector.extract_strided_slice %37 {offsets = [0, 64], sizes = [8, 32], strides = [1, 1]} : vector<8x96xf32> to vector<8x32xf32>
    %43 = arith.mulf %41, %14 : vector<8x32xf32>
    %44 = arith.mulf %40, %39 : vector<8x32xf32>
    %45 = arith.addf %43, %44 : vector<8x32xf32>
    %46 = math.tanh %45 : vector<8x32xf32>
    %47 = arith.mulf %42, %46 : vector<8x32xf32>
    %48 = vector.shape_cast %31 : vector<8x1xi1> to vector<8x1xi1>
    %49 = vector.broadcast %48 : vector<8x1xi1> to vector<8x32xi1>
    %50 = arith.select %49, %47, %14 : vector<8x32xi1>, vector<8x32xf32>
    %51 = arith.select %49, %45, %14 : vector<8x32xi1>, vector<8x32xf32>
    %52 = vector.broadcast %15 : i32 to vector<8x1xi32>
    %53 = arith.cmpi slt, %52, %10 : vector<8x1xi32>
    %54 = vector.extract_strided_slice %29 {offsets = [0, 0], sizes = [8, 96], strides = [1, 1]} : vector<8x128xf32> to vector<8x96xf32>
    %55 = arith.negf %54 : vector<8x96xf32>
    %56 = math.exp %55 : vector<8x96xf32>
    %cst_20 = arith.constant 1.000000e+00 : f32
    %57 = vector.broadcast %cst_20 : f32 to vector<8x96xf32>
    %58 = arith.addf %57, %56 : vector<8x96xf32>
    %59 = arith.divf %57, %58 : vector<8x96xf32>
    %60 = vector.extract_strided_slice %29 {offsets = [0, 96], sizes = [8, 32], strides = [1, 1]} : vector<8x128xf32> to vector<8x32xf32>
    %61 = math.tanh %60 : vector<8x32xf32>
    %62 = vector.extract_strided_slice %59 {offsets = [0, 0], sizes = [8, 32], strides = [1, 1]} : vector<8x96xf32> to vector<8x32xf32>
    %63 = vector.extract_strided_slice %59 {offsets = [0, 32], sizes = [8, 32], strides = [1, 1]} : vector<8x96xf32> to vector<8x32xf32>
    %64 = vector.extract_strided_slice %59 {offsets = [0, 64], sizes = [8, 32], strides = [1, 1]} : vector<8x96xf32> to vector<8x32xf32>
    %65 = arith.mulf %63, %14 : vector<8x32xf32>
    %66 = arith.mulf %62, %61 : vector<8x32xf32>
    %67 = arith.addf %65, %66 : vector<8x32xf32>
    %68 = math.tanh %67 : vector<8x32xf32>
    %69 = arith.mulf %64, %68 : vector<8x32xf32>
    %70 = vector.shape_cast %53 : vector<8x1xi1> to vector<8x1xi1>
    %71 = vector.broadcast %70 : vector<8x1xi1> to vector<8x32xi1>
    %72 = arith.select %71, %69, %14 : vector<8x32xi1>, vector<8x32xf32>
    %73 = arith.select %71, %67, %14 : vector<8x32xi1>, vector<8x32xf32>
    %c1_i32 = arith.constant 1 : i32
    %c7_i32_21 = arith.constant 7 : i32
    %74 = arith.subi %c7_i32_21, %c1_i32 : i32
    %75 = arith.truncf %50 : vector<8x32xf32> to vector<8x32xbf16>
    %cst_22 = arith.constant dense<0.000000e+00> : vector<8x128xf32>
    %76 = tpu.matmul %75, %12, %cst_22 {dimension_numbers = #tpu.dot_dimension_numbers<[1], [0], [0], [1], [0, 0, 1, 1], [], []>} : vector<8x32xbf16>, vector<32x128xbf16>, vector<8x128xf32> -> vector<8x128xf32>
    %77 = arith.index_cast %c1_i32 : i32 to index
    %c0_23 = arith.constant 0 : index
    %c0_24 = arith.constant 0 : index
    %78 = vector.load %arg7[%77, %c0_23, %c0_24] : memref<8x8x256xbf16, #tpu.memory_space<vmem>>, vector<1x8x128xbf16>
    %79 = vector.shape_cast %78 : vector<1x8x128xbf16> to vector<8x128xbf16>
    %80 = arith.extf %79 : vector<8x128xbf16> to vector<8x128xf32>
    %81 = arith.addf %76, %80 : vector<8x128xf32>
    %82 = arith.truncf %72 : vector<8x32xf32> to vector<8x32xbf16>
    %cst_25 = arith.constant dense<0.000000e+00> : vector<8x128xf32>
    %83 = tpu.matmul %82, %13, %cst_25 {dimension_numbers = #tpu.dot_dimension_numbers<[1], [0], [0], [1], [0, 0, 1, 1], [], []>} : vector<8x32xbf16>, vector<32x128xbf16>, vector<8x128xf32> -> vector<8x128xf32>
    %84 = arith.index_cast %74 : i32 to index
    %c0_26 = arith.constant 0 : index
    %c128_27 = arith.constant 128 : index
    %85 = vector.load %arg7[%84, %c0_26, %c128_27] : memref<8x8x256xbf16, #tpu.memory_space<vmem>>, vector<1x8x128xbf16>
    %86 = vector.shape_cast %85 : vector<1x8x128xbf16> to vector<8x128xbf16>
    %87 = arith.extf %86 : vector<8x128xbf16> to vector<8x128xf32>
    %88 = arith.addf %83, %87 : vector<8x128xf32>
    %89 = vector.broadcast %c1_i32 : i32 to vector<8x1xi32>
    %90 = arith.cmpi slt, %89, %10 : vector<8x1xi32>
    %91 = vector.extract_strided_slice %81 {offsets = [0, 0], sizes = [8, 96], strides = [1, 1]} : vector<8x128xf32> to vector<8x96xf32>
    %92 = arith.negf %91 : vector<8x96xf32>
    %93 = math.exp %92 : vector<8x96xf32>
    %cst_28 = arith.constant 1.000000e+00 : f32
    %94 = vector.broadcast %cst_28 : f32 to vector<8x96xf32>
    %95 = arith.addf %94, %93 : vector<8x96xf32>
    %96 = arith.divf %94, %95 : vector<8x96xf32>
    %97 = vector.extract_strided_slice %81 {offsets = [0, 96], sizes = [8, 32], strides = [1, 1]} : vector<8x128xf32> to vector<8x32xf32>
    %98 = math.tanh %97 : vector<8x32xf32>
    %99 = vector.extract_strided_slice %96 {offsets = [0, 0], sizes = [8, 32], strides = [1, 1]} : vector<8x96xf32> to vector<8x32xf32>
    %100 = vector.extract_strided_slice %96 {offsets = [0, 32], sizes = [8, 32], strides = [1, 1]} : vector<8x96xf32> to vector<8x32xf32>
    %101 = vector.extract_strided_slice %96 {offsets = [0, 64], sizes = [8, 32], strides = [1, 1]} : vector<8x96xf32> to vector<8x32xf32>
    %102 = arith.mulf %100, %51 : vector<8x32xf32>
    %103 = arith.mulf %99, %98 : vector<8x32xf32>
    %104 = arith.addf %102, %103 : vector<8x32xf32>
    %105 = math.tanh %104 : vector<8x32xf32>
    %106 = arith.mulf %101, %105 : vector<8x32xf32>
    %107 = vector.shape_cast %90 : vector<8x1xi1> to vector<8x1xi1>
    %108 = vector.broadcast %107 : vector<8x1xi1> to vector<8x32xi1>
    %109 = arith.select %108, %106, %50 : vector<8x32xi1>, vector<8x32xf32>
    %110 = arith.select %108, %104, %51 : vector<8x32xi1>, vector<8x32xf32>
    %111 = vector.broadcast %74 : i32 to vector<8x1xi32>
    %112 = arith.cmpi slt, %111, %10 : vector<8x1xi32>
    %113 = vector.extract_strided_slice %88 {offsets = [0, 0], sizes = [8, 96], strides = [1, 1]} : vector<8x128xf32> to vector<8x96xf32>
    %114 = arith.negf %113 : vector<8x96xf32>
    %115 = math.exp %114 : vector<8x96xf32>
    %cst_29 = arith.constant 1.000000e+00 : f32
    %116 = vector.broadcast %cst_29 : f32 to vector<8x96xf32>
    %117 = arith.addf %116, %115 : vector<8x96xf32>
    %118 = arith.divf %116, %117 : vector<8x96xf32>
    %119 = vector.extract_strided_slice %88 {offsets = [0, 96], sizes = [8, 32], strides = [1, 1]} : vector<8x128xf32> to vector<8x32xf32>
    %120 = math.tanh %119 : vector<8x32xf32>
    %121 = vector.extract_strided_slice %118 {offsets = [0, 0], sizes = [8, 32], strides = [1, 1]} : vector<8x96xf32> to vector<8x32xf32>
    %122 = vector.extract_strided_slice %118 {offsets = [0, 32], sizes = [8, 32], strides = [1, 1]} : vector<8x96xf32> to vector<8x32xf32>
    %123 = vector.extract_strided_slice %118 {offsets = [0, 64], sizes = [8, 32], strides = [1, 1]} : vector<8x96xf32> to vector<8x32xf32>
    %124 = arith.mulf %122, %73 : vector<8x32xf32>
    %125 = arith.mulf %121, %120 : vector<8x32xf32>
    %126 = arith.addf %124, %125 : vector<8x32xf32>
    %127 = math.tanh %126 : vector<8x32xf32>
    %128 = arith.mulf %123, %127 : vector<8x32xf32>
    %129 = vector.shape_cast %112 : vector<8x1xi1> to vector<8x1xi1>
    %130 = vector.broadcast %129 : vector<8x1xi1> to vector<8x32xi1>
    %131 = arith.select %130, %128, %72 : vector<8x32xi1>, vector<8x32xf32>
    %132 = arith.select %130, %126, %73 : vector<8x32xi1>, vector<8x32xf32>
    %c2_i32 = arith.constant 2 : i32
    %c7_i32_30 = arith.constant 7 : i32
    %133 = arith.subi %c7_i32_30, %c2_i32 : i32
    %134 = arith.truncf %109 : vector<8x32xf32> to vector<8x32xbf16>
    %cst_31 = arith.constant dense<0.000000e+00> : vector<8x128xf32>
    %135 = tpu.matmul %134, %12, %cst_31 {dimension_numbers = #tpu.dot_dimension_numbers<[1], [0], [0], [1], [0, 0, 1, 1], [], []>} : vector<8x32xbf16>, vector<32x128xbf16>, vector<8x128xf32> -> vector<8x128xf32>
    %136 = arith.index_cast %c2_i32 : i32 to index
    %c0_32 = arith.constant 0 : index
    %c0_33 = arith.constant 0 : index
    %137 = vector.load %arg7[%136, %c0_32, %c0_33] : memref<8x8x256xbf16, #tpu.memory_space<vmem>>, vector<1x8x128xbf16>
    %138 = vector.shape_cast %137 : vector<1x8x128xbf16> to vector<8x128xbf16>
    %139 = arith.extf %138 : vector<8x128xbf16> to vector<8x128xf32>
    %140 = arith.addf %135, %139 : vector<8x128xf32>
    %141 = arith.truncf %131 : vector<8x32xf32> to vector<8x32xbf16>
    %cst_34 = arith.constant dense<0.000000e+00> : vector<8x128xf32>
    %142 = tpu.matmul %141, %13, %cst_34 {dimension_numbers = #tpu.dot_dimension_numbers<[1], [0], [0], [1], [0, 0, 1, 1], [], []>} : vector<8x32xbf16>, vector<32x128xbf16>, vector<8x128xf32> -> vector<8x128xf32>
    %143 = arith.index_cast %133 : i32 to index
    %c0_35 = arith.constant 0 : index
    %c128_36 = arith.constant 128 : index
    %144 = vector.load %arg7[%143, %c0_35, %c128_36] : memref<8x8x256xbf16, #tpu.memory_space<vmem>>, vector<1x8x128xbf16>
    %145 = vector.shape_cast %144 : vector<1x8x128xbf16> to vector<8x128xbf16>
    %146 = arith.extf %145 : vector<8x128xbf16> to vector<8x128xf32>
    %147 = arith.addf %142, %146 : vector<8x128xf32>
    %148 = vector.broadcast %c2_i32 : i32 to vector<8x1xi32>
    %149 = arith.cmpi slt, %148, %10 : vector<8x1xi32>
    %150 = vector.extract_strided_slice %140 {offsets = [0, 0], sizes = [8, 96], strides = [1, 1]} : vector<8x128xf32> to vector<8x96xf32>
    %151 = arith.negf %150 : vector<8x96xf32>
    %152 = math.exp %151 : vector<8x96xf32>
    %cst_37 = arith.constant 1.000000e+00 : f32
    %153 = vector.broadcast %cst_37 : f32 to vector<8x96xf32>
    %154 = arith.addf %153, %152 : vector<8x96xf32>
    %155 = arith.divf %153, %154 : vector<8x96xf32>
    %156 = vector.extract_strided_slice %140 {offsets = [0, 96], sizes = [8, 32], strides = [1, 1]} : vector<8x128xf32> to vector<8x32xf32>
    %157 = math.tanh %156 : vector<8x32xf32>
    %158 = vector.extract_strided_slice %155 {offsets = [0, 0], sizes = [8, 32], strides = [1, 1]} : vector<8x96xf32> to vector<8x32xf32>
    %159 = vector.extract_strided_slice %155 {offsets = [0, 32], sizes = [8, 32], strides = [1, 1]} : vector<8x96xf32> to vector<8x32xf32>
    %160 = vector.extract_strided_slice %155 {offsets = [0, 64], sizes = [8, 32], strides = [1, 1]} : vector<8x96xf32> to vector<8x32xf32>
    %161 = arith.mulf %159, %110 : vector<8x32xf32>
    %162 = arith.mulf %158, %157 : vector<8x32xf32>
    %163 = arith.addf %161, %162 : vector<8x32xf32>
    %164 = math.tanh %163 : vector<8x32xf32>
    %165 = arith.mulf %160, %164 : vector<8x32xf32>
    %166 = vector.shape_cast %149 : vector<8x1xi1> to vector<8x1xi1>
    %167 = vector.broadcast %166 : vector<8x1xi1> to vector<8x32xi1>
    %168 = arith.select %167, %165, %109 : vector<8x32xi1>, vector<8x32xf32>
    %169 = arith.select %167, %163, %110 : vector<8x32xi1>, vector<8x32xf32>
    %170 = vector.broadcast %133 : i32 to vector<8x1xi32>
    %171 = arith.cmpi slt, %170, %10 : vector<8x1xi32>
    %172 = vector.extract_strided_slice %147 {offsets = [0, 0], sizes = [8, 96], strides = [1, 1]} : vector<8x128xf32> to vector<8x96xf32>
    %173 = arith.negf %172 : vector<8x96xf32>
    %174 = math.exp %173 : vector<8x96xf32>
    %cst_38 = arith.constant 1.000000e+00 : f32
    %175 = vector.broadcast %cst_38 : f32 to vector<8x96xf32>
    %176 = arith.addf %175, %174 : vector<8x96xf32>
    %177 = arith.divf %175, %176 : vector<8x96xf32>
    %178 = vector.extract_strided_slice %147 {offsets = [0, 96], sizes = [8, 32], strides = [1, 1]} : vector<8x128xf32> to vector<8x32xf32>
    %179 = math.tanh %178 : vector<8x32xf32>
    %180 = vector.extract_strided_slice %177 {offsets = [0, 0], sizes = [8, 32], strides = [1, 1]} : vector<8x96xf32> to vector<8x32xf32>
    %181 = vector.extract_strided_slice %177 {offsets = [0, 32], sizes = [8, 32], strides = [1, 1]} : vector<8x96xf32> to vector<8x32xf32>
    %182 = vector.extract_strided_slice %177 {offsets = [0, 64], sizes = [8, 32], strides = [1, 1]} : vector<8x96xf32> to vector<8x32xf32>
    %183 = arith.mulf %181, %132 : vector<8x32xf32>
    %184 = arith.mulf %180, %179 : vector<8x32xf32>
    %185 = arith.addf %183, %184 : vector<8x32xf32>
    %186 = math.tanh %185 : vector<8x32xf32>
    %187 = arith.mulf %182, %186 : vector<8x32xf32>
    %188 = vector.shape_cast %171 : vector<8x1xi1> to vector<8x1xi1>
    %189 = vector.broadcast %188 : vector<8x1xi1> to vector<8x32xi1>
    %190 = arith.select %189, %187, %131 : vector<8x32xi1>, vector<8x32xf32>
    %191 = arith.select %189, %185, %132 : vector<8x32xi1>, vector<8x32xf32>
    %c3_i32 = arith.constant 3 : i32
    %c7_i32_39 = arith.constant 7 : i32
    %192 = arith.subi %c7_i32_39, %c3_i32 : i32
    %193 = arith.truncf %168 : vector<8x32xf32> to vector<8x32xbf16>
    %cst_40 = arith.constant dense<0.000000e+00> : vector<8x128xf32>
    %194 = tpu.matmul %193, %12, %cst_40 {dimension_numbers = #tpu.dot_dimension_numbers<[1], [0], [0], [1], [0, 0, 1, 1], [], []>} : vector<8x32xbf16>, vector<32x128xbf16>, vector<8x128xf32> -> vector<8x128xf32>
    %195 = arith.index_cast %c3_i32 : i32 to index
    %c0_41 = arith.constant 0 : index
    %c0_42 = arith.constant 0 : index
    %196 = vector.load %arg7[%195, %c0_41, %c0_42] : memref<8x8x256xbf16, #tpu.memory_space<vmem>>, vector<1x8x128xbf16>
    %197 = vector.shape_cast %196 : vector<1x8x128xbf16> to vector<8x128xbf16>
    %198 = arith.extf %197 : vector<8x128xbf16> to vector<8x128xf32>
    %199 = arith.addf %194, %198 : vector<8x128xf32>
    %200 = arith.truncf %190 : vector<8x32xf32> to vector<8x32xbf16>
    %cst_43 = arith.constant dense<0.000000e+00> : vector<8x128xf32>
    %201 = tpu.matmul %200, %13, %cst_43 {dimension_numbers = #tpu.dot_dimension_numbers<[1], [0], [0], [1], [0, 0, 1, 1], [], []>} : vector<8x32xbf16>, vector<32x128xbf16>, vector<8x128xf32> -> vector<8x128xf32>
    %202 = arith.index_cast %192 : i32 to index
    %c0_44 = arith.constant 0 : index
    %c128_45 = arith.constant 128 : index
    %203 = vector.load %arg7[%202, %c0_44, %c128_45] : memref<8x8x256xbf16, #tpu.memory_space<vmem>>, vector<1x8x128xbf16>
    %204 = vector.shape_cast %203 : vector<1x8x128xbf16> to vector<8x128xbf16>
    %205 = arith.extf %204 : vector<8x128xbf16> to vector<8x128xf32>
    %206 = arith.addf %201, %205 : vector<8x128xf32>
    %207 = vector.broadcast %c3_i32 : i32 to vector<8x1xi32>
    %208 = arith.cmpi slt, %207, %10 : vector<8x1xi32>
    %209 = vector.extract_strided_slice %199 {offsets = [0, 0], sizes = [8, 96], strides = [1, 1]} : vector<8x128xf32> to vector<8x96xf32>
    %210 = arith.negf %209 : vector<8x96xf32>
    %211 = math.exp %210 : vector<8x96xf32>
    %cst_46 = arith.constant 1.000000e+00 : f32
    %212 = vector.broadcast %cst_46 : f32 to vector<8x96xf32>
    %213 = arith.addf %212, %211 : vector<8x96xf32>
    %214 = arith.divf %212, %213 : vector<8x96xf32>
    %215 = vector.extract_strided_slice %199 {offsets = [0, 96], sizes = [8, 32], strides = [1, 1]} : vector<8x128xf32> to vector<8x32xf32>
    %216 = math.tanh %215 : vector<8x32xf32>
    %217 = vector.extract_strided_slice %214 {offsets = [0, 0], sizes = [8, 32], strides = [1, 1]} : vector<8x96xf32> to vector<8x32xf32>
    %218 = vector.extract_strided_slice %214 {offsets = [0, 32], sizes = [8, 32], strides = [1, 1]} : vector<8x96xf32> to vector<8x32xf32>
    %219 = vector.extract_strided_slice %214 {offsets = [0, 64], sizes = [8, 32], strides = [1, 1]} : vector<8x96xf32> to vector<8x32xf32>
    %220 = arith.mulf %218, %169 : vector<8x32xf32>
    %221 = arith.mulf %217, %216 : vector<8x32xf32>
    %222 = arith.addf %220, %221 : vector<8x32xf32>
    %223 = math.tanh %222 : vector<8x32xf32>
    %224 = arith.mulf %219, %223 : vector<8x32xf32>
    %225 = vector.shape_cast %208 : vector<8x1xi1> to vector<8x1xi1>
    %226 = vector.broadcast %225 : vector<8x1xi1> to vector<8x32xi1>
    %227 = arith.select %226, %224, %168 : vector<8x32xi1>, vector<8x32xf32>
    %228 = arith.select %226, %222, %169 : vector<8x32xi1>, vector<8x32xf32>
    %229 = vector.broadcast %192 : i32 to vector<8x1xi32>
    %230 = arith.cmpi slt, %229, %10 : vector<8x1xi32>
    %231 = vector.extract_strided_slice %206 {offsets = [0, 0], sizes = [8, 96], strides = [1, 1]} : vector<8x128xf32> to vector<8x96xf32>
    %232 = arith.negf %231 : vector<8x96xf32>
    %233 = math.exp %232 : vector<8x96xf32>
    %cst_47 = arith.constant 1.000000e+00 : f32
    %234 = vector.broadcast %cst_47 : f32 to vector<8x96xf32>
    %235 = arith.addf %234, %233 : vector<8x96xf32>
    %236 = arith.divf %234, %235 : vector<8x96xf32>
    %237 = vector.extract_strided_slice %206 {offsets = [0, 96], sizes = [8, 32], strides = [1, 1]} : vector<8x128xf32> to vector<8x32xf32>
    %238 = math.tanh %237 : vector<8x32xf32>
    %239 = vector.extract_strided_slice %236 {offsets = [0, 0], sizes = [8, 32], strides = [1, 1]} : vector<8x96xf32> to vector<8x32xf32>
    %240 = vector.extract_strided_slice %236 {offsets = [0, 32], sizes = [8, 32], strides = [1, 1]} : vector<8x96xf32> to vector<8x32xf32>
    %241 = vector.extract_strided_slice %236 {offsets = [0, 64], sizes = [8, 32], strides = [1, 1]} : vector<8x96xf32> to vector<8x32xf32>
    %242 = arith.mulf %240, %191 : vector<8x32xf32>
    %243 = arith.mulf %239, %238 : vector<8x32xf32>
    %244 = arith.addf %242, %243 : vector<8x32xf32>
    %245 = math.tanh %244 : vector<8x32xf32>
    %246 = arith.mulf %241, %245 : vector<8x32xf32>
    %247 = vector.shape_cast %230 : vector<8x1xi1> to vector<8x1xi1>
    %248 = vector.broadcast %247 : vector<8x1xi1> to vector<8x32xi1>
    %249 = arith.select %248, %246, %190 : vector<8x32xi1>, vector<8x32xf32>
    %250 = arith.select %248, %244, %191 : vector<8x32xi1>, vector<8x32xf32>
    %c4_i32 = arith.constant 4 : i32
    %c7_i32_48 = arith.constant 7 : i32
    %251 = arith.subi %c7_i32_48, %c4_i32 : i32
    %252 = arith.truncf %227 : vector<8x32xf32> to vector<8x32xbf16>
    %cst_49 = arith.constant dense<0.000000e+00> : vector<8x128xf32>
    %253 = tpu.matmul %252, %12, %cst_49 {dimension_numbers = #tpu.dot_dimension_numbers<[1], [0], [0], [1], [0, 0, 1, 1], [], []>} : vector<8x32xbf16>, vector<32x128xbf16>, vector<8x128xf32> -> vector<8x128xf32>
    %254 = arith.index_cast %c4_i32 : i32 to index
    %c0_50 = arith.constant 0 : index
    %c0_51 = arith.constant 0 : index
    %255 = vector.load %arg7[%254, %c0_50, %c0_51] : memref<8x8x256xbf16, #tpu.memory_space<vmem>>, vector<1x8x128xbf16>
    %256 = vector.shape_cast %255 : vector<1x8x128xbf16> to vector<8x128xbf16>
    %257 = arith.extf %256 : vector<8x128xbf16> to vector<8x128xf32>
    %258 = arith.addf %253, %257 : vector<8x128xf32>
    %259 = arith.truncf %249 : vector<8x32xf32> to vector<8x32xbf16>
    %cst_52 = arith.constant dense<0.000000e+00> : vector<8x128xf32>
    %260 = tpu.matmul %259, %13, %cst_52 {dimension_numbers = #tpu.dot_dimension_numbers<[1], [0], [0], [1], [0, 0, 1, 1], [], []>} : vector<8x32xbf16>, vector<32x128xbf16>, vector<8x128xf32> -> vector<8x128xf32>
    %261 = arith.index_cast %251 : i32 to index
    %c0_53 = arith.constant 0 : index
    %c128_54 = arith.constant 128 : index
    %262 = vector.load %arg7[%261, %c0_53, %c128_54] : memref<8x8x256xbf16, #tpu.memory_space<vmem>>, vector<1x8x128xbf16>
    %263 = vector.shape_cast %262 : vector<1x8x128xbf16> to vector<8x128xbf16>
    %264 = arith.extf %263 : vector<8x128xbf16> to vector<8x128xf32>
    %265 = arith.addf %260, %264 : vector<8x128xf32>
    %266 = vector.broadcast %c4_i32 : i32 to vector<8x1xi32>
    %267 = arith.cmpi slt, %266, %10 : vector<8x1xi32>
    %268 = vector.extract_strided_slice %258 {offsets = [0, 0], sizes = [8, 96], strides = [1, 1]} : vector<8x128xf32> to vector<8x96xf32>
    %269 = arith.negf %268 : vector<8x96xf32>
    %270 = math.exp %269 : vector<8x96xf32>
    %cst_55 = arith.constant 1.000000e+00 : f32
    %271 = vector.broadcast %cst_55 : f32 to vector<8x96xf32>
    %272 = arith.addf %271, %270 : vector<8x96xf32>
    %273 = arith.divf %271, %272 : vector<8x96xf32>
    %274 = vector.extract_strided_slice %258 {offsets = [0, 96], sizes = [8, 32], strides = [1, 1]} : vector<8x128xf32> to vector<8x32xf32>
    %275 = math.tanh %274 : vector<8x32xf32>
    %276 = vector.extract_strided_slice %273 {offsets = [0, 0], sizes = [8, 32], strides = [1, 1]} : vector<8x96xf32> to vector<8x32xf32>
    %277 = vector.extract_strided_slice %273 {offsets = [0, 32], sizes = [8, 32], strides = [1, 1]} : vector<8x96xf32> to vector<8x32xf32>
    %278 = vector.extract_strided_slice %273 {offsets = [0, 64], sizes = [8, 32], strides = [1, 1]} : vector<8x96xf32> to vector<8x32xf32>
    %279 = arith.mulf %277, %228 : vector<8x32xf32>
    %280 = arith.mulf %276, %275 : vector<8x32xf32>
    %281 = arith.addf %279, %280 : vector<8x32xf32>
    %282 = math.tanh %281 : vector<8x32xf32>
    %283 = arith.mulf %278, %282 : vector<8x32xf32>
    %284 = vector.shape_cast %267 : vector<8x1xi1> to vector<8x1xi1>
    %285 = vector.broadcast %284 : vector<8x1xi1> to vector<8x32xi1>
    %286 = arith.select %285, %283, %227 : vector<8x32xi1>, vector<8x32xf32>
    %287 = arith.select %285, %281, %228 : vector<8x32xi1>, vector<8x32xf32>
    %288 = vector.broadcast %251 : i32 to vector<8x1xi32>
    %289 = arith.cmpi slt, %288, %10 : vector<8x1xi32>
    %290 = vector.extract_strided_slice %265 {offsets = [0, 0], sizes = [8, 96], strides = [1, 1]} : vector<8x128xf32> to vector<8x96xf32>
    %291 = arith.negf %290 : vector<8x96xf32>
    %292 = math.exp %291 : vector<8x96xf32>
    %cst_56 = arith.constant 1.000000e+00 : f32
    %293 = vector.broadcast %cst_56 : f32 to vector<8x96xf32>
    %294 = arith.addf %293, %292 : vector<8x96xf32>
    %295 = arith.divf %293, %294 : vector<8x96xf32>
    %296 = vector.extract_strided_slice %265 {offsets = [0, 96], sizes = [8, 32], strides = [1, 1]} : vector<8x128xf32> to vector<8x32xf32>
    %297 = math.tanh %296 : vector<8x32xf32>
    %298 = vector.extract_strided_slice %295 {offsets = [0, 0], sizes = [8, 32], strides = [1, 1]} : vector<8x96xf32> to vector<8x32xf32>
    %299 = vector.extract_strided_slice %295 {offsets = [0, 32], sizes = [8, 32], strides = [1, 1]} : vector<8x96xf32> to vector<8x32xf32>
    %300 = vector.extract_strided_slice %295 {offsets = [0, 64], sizes = [8, 32], strides = [1, 1]} : vector<8x96xf32> to vector<8x32xf32>
    %301 = arith.mulf %299, %250 : vector<8x32xf32>
    %302 = arith.mulf %298, %297 : vector<8x32xf32>
    %303 = arith.addf %301, %302 : vector<8x32xf32>
    %304 = math.tanh %303 : vector<8x32xf32>
    %305 = arith.mulf %300, %304 : vector<8x32xf32>
    %306 = vector.shape_cast %289 : vector<8x1xi1> to vector<8x1xi1>
    %307 = vector.broadcast %306 : vector<8x1xi1> to vector<8x32xi1>
    %308 = arith.select %307, %305, %249 : vector<8x32xi1>, vector<8x32xf32>
    %309 = arith.select %307, %303, %250 : vector<8x32xi1>, vector<8x32xf32>
    %c5_i32 = arith.constant 5 : i32
    %c7_i32_57 = arith.constant 7 : i32
    %310 = arith.subi %c7_i32_57, %c5_i32 : i32
    %311 = arith.truncf %286 : vector<8x32xf32> to vector<8x32xbf16>
    %cst_58 = arith.constant dense<0.000000e+00> : vector<8x128xf32>
    %312 = tpu.matmul %311, %12, %cst_58 {dimension_numbers = #tpu.dot_dimension_numbers<[1], [0], [0], [1], [0, 0, 1, 1], [], []>} : vector<8x32xbf16>, vector<32x128xbf16>, vector<8x128xf32> -> vector<8x128xf32>
    %313 = arith.index_cast %c5_i32 : i32 to index
    %c0_59 = arith.constant 0 : index
    %c0_60 = arith.constant 0 : index
    %314 = vector.load %arg7[%313, %c0_59, %c0_60] : memref<8x8x256xbf16, #tpu.memory_space<vmem>>, vector<1x8x128xbf16>
    %315 = vector.shape_cast %314 : vector<1x8x128xbf16> to vector<8x128xbf16>
    %316 = arith.extf %315 : vector<8x128xbf16> to vector<8x128xf32>
    %317 = arith.addf %312, %316 : vector<8x128xf32>
    %318 = arith.truncf %308 : vector<8x32xf32> to vector<8x32xbf16>
    %cst_61 = arith.constant dense<0.000000e+00> : vector<8x128xf32>
    %319 = tpu.matmul %318, %13, %cst_61 {dimension_numbers = #tpu.dot_dimension_numbers<[1], [0], [0], [1], [0, 0, 1, 1], [], []>} : vector<8x32xbf16>, vector<32x128xbf16>, vector<8x128xf32> -> vector<8x128xf32>
    %320 = arith.index_cast %310 : i32 to index
    %c0_62 = arith.constant 0 : index
    %c128_63 = arith.constant 128 : index
    %321 = vector.load %arg7[%320, %c0_62, %c128_63] : memref<8x8x256xbf16, #tpu.memory_space<vmem>>, vector<1x8x128xbf16>
    %322 = vector.shape_cast %321 : vector<1x8x128xbf16> to vector<8x128xbf16>
    %323 = arith.extf %322 : vector<8x128xbf16> to vector<8x128xf32>
    %324 = arith.addf %319, %323 : vector<8x128xf32>
    %325 = vector.broadcast %c5_i32 : i32 to vector<8x1xi32>
    %326 = arith.cmpi slt, %325, %10 : vector<8x1xi32>
    %327 = vector.extract_strided_slice %317 {offsets = [0, 0], sizes = [8, 96], strides = [1, 1]} : vector<8x128xf32> to vector<8x96xf32>
    %328 = arith.negf %327 : vector<8x96xf32>
    %329 = math.exp %328 : vector<8x96xf32>
    %cst_64 = arith.constant 1.000000e+00 : f32
    %330 = vector.broadcast %cst_64 : f32 to vector<8x96xf32>
    %331 = arith.addf %330, %329 : vector<8x96xf32>
    %332 = arith.divf %330, %331 : vector<8x96xf32>
    %333 = vector.extract_strided_slice %317 {offsets = [0, 96], sizes = [8, 32], strides = [1, 1]} : vector<8x128xf32> to vector<8x32xf32>
    %334 = math.tanh %333 : vector<8x32xf32>
    %335 = vector.extract_strided_slice %332 {offsets = [0, 0], sizes = [8, 32], strides = [1, 1]} : vector<8x96xf32> to vector<8x32xf32>
    %336 = vector.extract_strided_slice %332 {offsets = [0, 32], sizes = [8, 32], strides = [1, 1]} : vector<8x96xf32> to vector<8x32xf32>
    %337 = vector.extract_strided_slice %332 {offsets = [0, 64], sizes = [8, 32], strides = [1, 1]} : vector<8x96xf32> to vector<8x32xf32>
    %338 = arith.mulf %336, %287 : vector<8x32xf32>
    %339 = arith.mulf %335, %334 : vector<8x32xf32>
    %340 = arith.addf %338, %339 : vector<8x32xf32>
    %341 = math.tanh %340 : vector<8x32xf32>
    %342 = arith.mulf %337, %341 : vector<8x32xf32>
    %343 = vector.shape_cast %326 : vector<8x1xi1> to vector<8x1xi1>
    %344 = vector.broadcast %343 : vector<8x1xi1> to vector<8x32xi1>
    %345 = arith.select %344, %342, %286 : vector<8x32xi1>, vector<8x32xf32>
    %346 = arith.select %344, %340, %287 : vector<8x32xi1>, vector<8x32xf32>
    %347 = vector.broadcast %310 : i32 to vector<8x1xi32>
    %348 = arith.cmpi slt, %347, %10 : vector<8x1xi32>
    %349 = vector.extract_strided_slice %324 {offsets = [0, 0], sizes = [8, 96], strides = [1, 1]} : vector<8x128xf32> to vector<8x96xf32>
    %350 = arith.negf %349 : vector<8x96xf32>
    %351 = math.exp %350 : vector<8x96xf32>
    %cst_65 = arith.constant 1.000000e+00 : f32
    %352 = vector.broadcast %cst_65 : f32 to vector<8x96xf32>
    %353 = arith.addf %352, %351 : vector<8x96xf32>
    %354 = arith.divf %352, %353 : vector<8x96xf32>
    %355 = vector.extract_strided_slice %324 {offsets = [0, 96], sizes = [8, 32], strides = [1, 1]} : vector<8x128xf32> to vector<8x32xf32>
    %356 = math.tanh %355 : vector<8x32xf32>
    %357 = vector.extract_strided_slice %354 {offsets = [0, 0], sizes = [8, 32], strides = [1, 1]} : vector<8x96xf32> to vector<8x32xf32>
    %358 = vector.extract_strided_slice %354 {offsets = [0, 32], sizes = [8, 32], strides = [1, 1]} : vector<8x96xf32> to vector<8x32xf32>
    %359 = vector.extract_strided_slice %354 {offsets = [0, 64], sizes = [8, 32], strides = [1, 1]} : vector<8x96xf32> to vector<8x32xf32>
    %360 = arith.mulf %358, %309 : vector<8x32xf32>
    %361 = arith.mulf %357, %356 : vector<8x32xf32>
    %362 = arith.addf %360, %361 : vector<8x32xf32>
    %363 = math.tanh %362 : vector<8x32xf32>
    %364 = arith.mulf %359, %363 : vector<8x32xf32>
    %365 = vector.shape_cast %348 : vector<8x1xi1> to vector<8x1xi1>
    %366 = vector.broadcast %365 : vector<8x1xi1> to vector<8x32xi1>
    %367 = arith.select %366, %364, %308 : vector<8x32xi1>, vector<8x32xf32>
    %368 = arith.select %366, %362, %309 : vector<8x32xi1>, vector<8x32xf32>
    %c6_i32 = arith.constant 6 : i32
    %c7_i32_66 = arith.constant 7 : i32
    %369 = arith.subi %c7_i32_66, %c6_i32 : i32
    %370 = arith.truncf %345 : vector<8x32xf32> to vector<8x32xbf16>
    %cst_67 = arith.constant dense<0.000000e+00> : vector<8x128xf32>
    %371 = tpu.matmul %370, %12, %cst_67 {dimension_numbers = #tpu.dot_dimension_numbers<[1], [0], [0], [1], [0, 0, 1, 1], [], []>} : vector<8x32xbf16>, vector<32x128xbf16>, vector<8x128xf32> -> vector<8x128xf32>
    %372 = arith.index_cast %c6_i32 : i32 to index
    %c0_68 = arith.constant 0 : index
    %c0_69 = arith.constant 0 : index
    %373 = vector.load %arg7[%372, %c0_68, %c0_69] : memref<8x8x256xbf16, #tpu.memory_space<vmem>>, vector<1x8x128xbf16>
    %374 = vector.shape_cast %373 : vector<1x8x128xbf16> to vector<8x128xbf16>
    %375 = arith.extf %374 : vector<8x128xbf16> to vector<8x128xf32>
    %376 = arith.addf %371, %375 : vector<8x128xf32>
    %377 = arith.truncf %367 : vector<8x32xf32> to vector<8x32xbf16>
    %cst_70 = arith.constant dense<0.000000e+00> : vector<8x128xf32>
    %378 = tpu.matmul %377, %13, %cst_70 {dimension_numbers = #tpu.dot_dimension_numbers<[1], [0], [0], [1], [0, 0, 1, 1], [], []>} : vector<8x32xbf16>, vector<32x128xbf16>, vector<8x128xf32> -> vector<8x128xf32>
    %379 = arith.index_cast %369 : i32 to index
    %c0_71 = arith.constant 0 : index
    %c128_72 = arith.constant 128 : index
    %380 = vector.load %arg7[%379, %c0_71, %c128_72] : memref<8x8x256xbf16, #tpu.memory_space<vmem>>, vector<1x8x128xbf16>
    %381 = vector.shape_cast %380 : vector<1x8x128xbf16> to vector<8x128xbf16>
    %382 = arith.extf %381 : vector<8x128xbf16> to vector<8x128xf32>
    %383 = arith.addf %378, %382 : vector<8x128xf32>
    %384 = vector.broadcast %c6_i32 : i32 to vector<8x1xi32>
    %385 = arith.cmpi slt, %384, %10 : vector<8x1xi32>
    %386 = vector.extract_strided_slice %376 {offsets = [0, 0], sizes = [8, 96], strides = [1, 1]} : vector<8x128xf32> to vector<8x96xf32>
    %387 = arith.negf %386 : vector<8x96xf32>
    %388 = math.exp %387 : vector<8x96xf32>
    %cst_73 = arith.constant 1.000000e+00 : f32
    %389 = vector.broadcast %cst_73 : f32 to vector<8x96xf32>
    %390 = arith.addf %389, %388 : vector<8x96xf32>
    %391 = arith.divf %389, %390 : vector<8x96xf32>
    %392 = vector.extract_strided_slice %376 {offsets = [0, 96], sizes = [8, 32], strides = [1, 1]} : vector<8x128xf32> to vector<8x32xf32>
    %393 = math.tanh %392 : vector<8x32xf32>
    %394 = vector.extract_strided_slice %391 {offsets = [0, 0], sizes = [8, 32], strides = [1, 1]} : vector<8x96xf32> to vector<8x32xf32>
    %395 = vector.extract_strided_slice %391 {offsets = [0, 32], sizes = [8, 32], strides = [1, 1]} : vector<8x96xf32> to vector<8x32xf32>
    %396 = vector.extract_strided_slice %391 {offsets = [0, 64], sizes = [8, 32], strides = [1, 1]} : vector<8x96xf32> to vector<8x32xf32>
    %397 = arith.mulf %395, %346 : vector<8x32xf32>
    %398 = arith.mulf %394, %393 : vector<8x32xf32>
    %399 = arith.addf %397, %398 : vector<8x32xf32>
    %400 = math.tanh %399 : vector<8x32xf32>
    %401 = arith.mulf %396, %400 : vector<8x32xf32>
    %402 = vector.shape_cast %385 : vector<8x1xi1> to vector<8x1xi1>
    %403 = vector.broadcast %402 : vector<8x1xi1> to vector<8x32xi1>
    %404 = arith.select %403, %401, %345 : vector<8x32xi1>, vector<8x32xf32>
    %405 = arith.select %403, %399, %346 : vector<8x32xi1>, vector<8x32xf32>
    %406 = vector.broadcast %369 : i32 to vector<8x1xi32>
    %407 = arith.cmpi slt, %406, %10 : vector<8x1xi32>
    %408 = vector.extract_strided_slice %383 {offsets = [0, 0], sizes = [8, 96], strides = [1, 1]} : vector<8x128xf32> to vector<8x96xf32>
    %409 = arith.negf %408 : vector<8x96xf32>
    %410 = math.exp %409 : vector<8x96xf32>
    %cst_74 = arith.constant 1.000000e+00 : f32
    %411 = vector.broadcast %cst_74 : f32 to vector<8x96xf32>
    %412 = arith.addf %411, %410 : vector<8x96xf32>
    %413 = arith.divf %411, %412 : vector<8x96xf32>
    %414 = vector.extract_strided_slice %383 {offsets = [0, 96], sizes = [8, 32], strides = [1, 1]} : vector<8x128xf32> to vector<8x32xf32>
    %415 = math.tanh %414 : vector<8x32xf32>
    %416 = vector.extract_strided_slice %413 {offsets = [0, 0], sizes = [8, 32], strides = [1, 1]} : vector<8x96xf32> to vector<8x32xf32>
    %417 = vector.extract_strided_slice %413 {offsets = [0, 32], sizes = [8, 32], strides = [1, 1]} : vector<8x96xf32> to vector<8x32xf32>
    %418 = vector.extract_strided_slice %413 {offsets = [0, 64], sizes = [8, 32], strides = [1, 1]} : vector<8x96xf32> to vector<8x32xf32>
    %419 = arith.mulf %417, %368 : vector<8x32xf32>
    %420 = arith.mulf %416, %415 : vector<8x32xf32>
    %421 = arith.addf %419, %420 : vector<8x32xf32>
    %422 = math.tanh %421 : vector<8x32xf32>
    %423 = arith.mulf %418, %422 : vector<8x32xf32>
    %424 = vector.shape_cast %407 : vector<8x1xi1> to vector<8x1xi1>
    %425 = vector.broadcast %424 : vector<8x1xi1> to vector<8x32xi1>
    %426 = arith.select %425, %423, %367 : vector<8x32xi1>, vector<8x32xf32>
    %427 = arith.select %425, %421, %368 : vector<8x32xi1>, vector<8x32xf32>
    %c7_i32_75 = arith.constant 7 : i32
    %c7_i32_76 = arith.constant 7 : i32
    %428 = arith.subi %c7_i32_76, %c7_i32_75 : i32
    %429 = arith.truncf %404 : vector<8x32xf32> to vector<8x32xbf16>
    %cst_77 = arith.constant dense<0.000000e+00> : vector<8x128xf32>
    %430 = tpu.matmul %429, %12, %cst_77 {dimension_numbers = #tpu.dot_dimension_numbers<[1], [0], [0], [1], [0, 0, 1, 1], [], []>} : vector<8x32xbf16>, vector<32x128xbf16>, vector<8x128xf32> -> vector<8x128xf32>
    %431 = arith.index_cast %c7_i32_75 : i32 to index
    %c0_78 = arith.constant 0 : index
    %c0_79 = arith.constant 0 : index
    %432 = vector.load %arg7[%431, %c0_78, %c0_79] : memref<8x8x256xbf16, #tpu.memory_space<vmem>>, vector<1x8x128xbf16>
    %433 = vector.shape_cast %432 : vector<1x8x128xbf16> to vector<8x128xbf16>
    %434 = arith.extf %433 : vector<8x128xbf16> to vector<8x128xf32>
    %435 = arith.addf %430, %434 : vector<8x128xf32>
    %436 = arith.truncf %426 : vector<8x32xf32> to vector<8x32xbf16>
    %cst_80 = arith.constant dense<0.000000e+00> : vector<8x128xf32>
    %437 = tpu.matmul %436, %13, %cst_80 {dimension_numbers = #tpu.dot_dimension_numbers<[1], [0], [0], [1], [0, 0, 1, 1], [], []>} : vector<8x32xbf16>, vector<32x128xbf16>, vector<8x128xf32> -> vector<8x128xf32>
    %438 = arith.index_cast %428 : i32 to index
    %c0_81 = arith.constant 0 : index
    %c128_82 = arith.constant 128 : index
    %439 = vector.load %arg7[%438, %c0_81, %c128_82] : memref<8x8x256xbf16, #tpu.memory_space<vmem>>, vector<1x8x128xbf16>
    %440 = vector.shape_cast %439 : vector<1x8x128xbf16> to vector<8x128xbf16>
    %441 = arith.extf %440 : vector<8x128xbf16> to vector<8x128xf32>
    %442 = arith.addf %437, %441 : vector<8x128xf32>
    %443 = vector.broadcast %c7_i32_75 : i32 to vector<8x1xi32>
    %444 = arith.cmpi slt, %443, %10 : vector<8x1xi32>
    %445 = vector.extract_strided_slice %435 {offsets = [0, 0], sizes = [8, 96], strides = [1, 1]} : vector<8x128xf32> to vector<8x96xf32>
    %446 = arith.negf %445 : vector<8x96xf32>
    %447 = math.exp %446 : vector<8x96xf32>
    %cst_83 = arith.constant 1.000000e+00 : f32
    %448 = vector.broadcast %cst_83 : f32 to vector<8x96xf32>
    %449 = arith.addf %448, %447 : vector<8x96xf32>
    %450 = arith.divf %448, %449 : vector<8x96xf32>
    %451 = vector.extract_strided_slice %435 {offsets = [0, 96], sizes = [8, 32], strides = [1, 1]} : vector<8x128xf32> to vector<8x32xf32>
    %452 = math.tanh %451 : vector<8x32xf32>
    %453 = vector.extract_strided_slice %450 {offsets = [0, 0], sizes = [8, 32], strides = [1, 1]} : vector<8x96xf32> to vector<8x32xf32>
    %454 = vector.extract_strided_slice %450 {offsets = [0, 32], sizes = [8, 32], strides = [1, 1]} : vector<8x96xf32> to vector<8x32xf32>
    %455 = vector.extract_strided_slice %450 {offsets = [0, 64], sizes = [8, 32], strides = [1, 1]} : vector<8x96xf32> to vector<8x32xf32>
    %456 = arith.mulf %454, %405 : vector<8x32xf32>
    %457 = arith.mulf %453, %452 : vector<8x32xf32>
    %458 = arith.addf %456, %457 : vector<8x32xf32>
    %459 = math.tanh %458 : vector<8x32xf32>
    %460 = arith.mulf %455, %459 : vector<8x32xf32>
    %461 = vector.shape_cast %444 : vector<8x1xi1> to vector<8x1xi1>
    %462 = vector.broadcast %461 : vector<8x1xi1> to vector<8x32xi1>
    %463 = arith.select %462, %460, %404 : vector<8x32xi1>, vector<8x32xf32>
    %464 = arith.select %462, %458, %405 : vector<8x32xi1>, vector<8x32xf32>
    %465 = vector.broadcast %428 : i32 to vector<8x1xi32>
    %466 = arith.cmpi slt, %465, %10 : vector<8x1xi32>
    %467 = vector.extract_strided_slice %442 {offsets = [0, 0], sizes = [8, 96], strides = [1, 1]} : vector<8x128xf32> to vector<8x96xf32>
    %468 = arith.negf %467 : vector<8x96xf32>
    %469 = math.exp %468 : vector<8x96xf32>
    %cst_84 = arith.constant 1.000000e+00 : f32
    %470 = vector.broadcast %cst_84 : f32 to vector<8x96xf32>
    %471 = arith.addf %470, %469 : vector<8x96xf32>
    %472 = arith.divf %470, %471 : vector<8x96xf32>
    %473 = vector.extract_strided_slice %442 {offsets = [0, 96], sizes = [8, 32], strides = [1, 1]} : vector<8x128xf32> to vector<8x32xf32>
    %474 = math.tanh %473 : vector<8x32xf32>
    %475 = vector.extract_strided_slice %472 {offsets = [0, 0], sizes = [8, 32], strides = [1, 1]} : vector<8x96xf32> to vector<8x32xf32>
    %476 = vector.extract_strided_slice %472 {offsets = [0, 32], sizes = [8, 32], strides = [1, 1]} : vector<8x96xf32> to vector<8x32xf32>
    %477 = vector.extract_strided_slice %472 {offsets = [0, 64], sizes = [8, 32], strides = [1, 1]} : vector<8x96xf32> to vector<8x32xf32>
    %478 = arith.mulf %476, %427 : vector<8x32xf32>
    %479 = arith.mulf %475, %474 : vector<8x32xf32>
    %480 = arith.addf %478, %479 : vector<8x32xf32>
    %481 = math.tanh %480 : vector<8x32xf32>
    %482 = arith.mulf %477, %481 : vector<8x32xf32>
    %483 = vector.shape_cast %466 : vector<8x1xi1> to vector<8x1xi1>
    %484 = vector.broadcast %483 : vector<8x1xi1> to vector<8x32xi1>
    %485 = arith.select %484, %482, %426 : vector<8x32xi1>, vector<8x32xf32>
    %486 = arith.select %484, %480, %427 : vector<8x32xi1>, vector<8x32xf32>
    %c8_i32 = arith.constant 8 : i32
    %487 = tpu.concatenate %463, %485 in 1 : vector<8x32xf32>, vector<8x32xf32> -> vector<8x64xf32>
    %c0_85 = arith.constant 0 : index
    %c0_86 = arith.constant 0 : index
    %488 = vector.load %arg6[%c0_85, %c0_86] : memref<8x64xf32, #tpu.memory_space<vmem>>, vector<8x64xf32>
    tpu.vector_store %arg6[%c0_85, %c0_86], %487 {strides = array<i32>} : memref<8x64xf32, #tpu.memory_space<vmem>>, vector<8x64xf32>,
    return
  }
  func.func @transform_0(%arg0: i32) -> (i32, i32) {
    %c0_i32 = arith.constant 0 : i32
    %c0_i32_0 = arith.constant 0 : i32
    return %arg0, %c0_i32 : i32, i32
  }
  func.func @transform_1(%arg0: i32) -> (i32, i32, i32) {
    %c0_i32 = arith.constant 0 : i32
    %c0_i32_0 = arith.constant 0 : i32
    %c0_i32_1 = arith.constant 0 : i32
    return %c0_i32, %arg0, %c0_i32_0 : i32, i32, i32
  }
  func.func @transform_2(%arg0: i32) -> (i32, i32) {
    %c0_i32 = arith.constant 0 : i32
    %c0_i32_0 = arith.constant 0 : i32
    %c0_i32_1 = arith.constant 0 : i32
    return %c0_i32, %c0_i32_0 : i32, i32
  }
  func.func @transform_3(%arg0: i32) -> (i32, i32) {
    %c0_i32 = arith.constant 0 : i32
    %c0_i32_0 = arith.constant 0 : i32
    %c0_i32_1 = arith.constant 0 : i32
    return %c0_i32, %c0_i32_0 : i32, i32
  }
  func.func @transform_4(%arg0: i32) -> (i32, i32) {
    %c0_i32 = arith.constant 0 : i32
    %c0_i32_0 = arith.constant 0 : i32
    %c0_i32_1 = arith.constant 0 : i32
    return %c0_i32, %c0_i32_0 : i32, i32
  }
  func.func @transform_5(%arg0: i32) -> (i32, i32) {
    %c0_i32 = arith.constant 0 : i32
    %c0_i32_0 = arith.constant 0 : i32
    return %arg0, %c0_i32 : i32, i32
  }
}

</mosaic_0001>

<llo_original>
// kernel: tpu_custom_call.1
$region0: #{tpu_custom_call.1}
  #allocation0 [shape = 'u32[]', space=smem, size = 0x4, offset = 0x4, fixed_abs, tag = 'smem constant byte address 0x4 - core index']
  #allocation1 [shape = 'u32[144,128]{1,0:T(1,128)}', space=vmem, size = 0x12000, scoped, tag = 'internal scratch']
  #allocation2 [shape = 'bf16[8,8,256]{2,1,0:T(8,128)(2,1)}', space=vmem, size = 0x8000, scoped, tag = 'scratch operand']
  %s0 = inlined_call_operand.vmem [shape: s32[8,1], index: 0, kind: input, shape index: {}]
  %s1 = inlined_call_operand.hbm [shape: bf16[8,8,16], index: 1, kind: input, shape index: {}]
  %s2 = inlined_call_operand.hbm [shape: bf16[16,256], index: 2, kind: input, shape index: {}]
  %s3 = inlined_call_operand.vmem [shape: f32[1,256], index: 3, kind: input, shape index: {}]
  %s4 = inlined_call_operand.hbm [shape: bf16[64,128], index: 4, kind: input, shape index: {}]
  %s5 = inlined_call_operand.hbm [shape: f32[8,64], index: 5, kind: output, shape index: {}]
  %s6 = sld [smem:[#allocation0]]
  $region42: #{tpu_custom_call.1} parent=0
    _
  %s8 = ssub.s32 1, %s6
  %s9 = scalar_select 0, %s8, %s6
  $region1: #{tpu_custom_call.1} parent=0
    #allocation3 [shape = 'u8[16384]{0}', space=vmem, size = 0x4000, scoped, tag = 'input window, operand 1, single buffered']
    #allocation4 [shape = 's32[1]{0}', space=sflag, size = 0x4, scoped, tag = 'scoped memory for tpu_custom_call.1']
    #allocation5 [shape = 's32[1]{0}', space=sflag, size = 0x4, scoped, tag = 'scoped memory for tpu_custom_call.1']
    #allocation6 [shape = 'u8[8192]{0}', space=vmem, size = 0x2000, scoped, tag = 'input window, operand 2, single buffered']
    #allocation7 [shape = 's32[1]{0}', space=sflag, size = 0x4, scoped, tag = 'scoped memory for tpu_custom_call.1']
    #allocation8 [shape = 'u8[16384]{0}', space=vmem, size = 0x4000, scoped, tag = 'input window, operand 4, single buffered']
    #allocation9 [shape = 'u8[4096]{0}', space=vmem, size = 0x1000, scoped, tag = 'output window, operand 0, single buffered']
    %10 = vsyncpa [#allocation4], 0
    %11 = vsyncpa [#allocation7], 0
    %12 = vsyncpa [#allocation5], 0
    // Predicated region
    $region2: #{tpu_custom_call.1} parent=1 // pred_check
      _
    $region3: #{tpu_custom_call.1} parent=1 // pred_check_branch
      %14 = sbr.rel (0) target = $region5
    $region4: #{tpu_custom_call.1} parent=1 // pred_region
      _
    $region5: #{tpu_custom_call.1} parent=1 // pred_fallthru
      _
    // Predicated region
    $region6: #{tpu_custom_call.1} parent=1 // pred_check
      _
    $region7: #{tpu_custom_call.1} parent=1 // pred_check_branch
      %16 = sbr.rel (0) target = $region9
    $region8: #{tpu_custom_call.1} parent=1 // pred_region
      %s18 = ssub.s32 512, 512
      %19 = vsyncadd [#allocation4], %s18
      %s20 = sshll.u32 [#allocation3], 4
      %s21 = int_to_ptr.vmem [resolvable:$true] %s20
      %26 = dma.hbm_to_vmem [thread:$0]  %s1, 512, %s21, [#allocation4], 64, 64, 4
    $region9: #{tpu_custom_call.1} parent=1 // pred_fallthru
      _
    // Predicated region
    $region10: #{tpu_custom_call.1} parent=1 // pred_check
      _
    $region11: #{tpu_custom_call.1} parent=1 // pred_check_branch
      %28 = sbr.rel (0) target = $region13
    $region12: #{tpu_custom_call.1} parent=1 // pred_region
      %s30 = ssub.s32 256, 256
      %31 = vsyncadd [#allocation7], %s30
      %s32 = sshll.u32 [#allocation6], 4
      %s33 = int_to_ptr.vmem [resolvable:$true] %s32
      %38 = dma.hbm_to_vmem [thread:$0]  %s2, 256, %s33, [#allocation7], 128, 128, 8
    $region13: #{tpu_custom_call.1} parent=1 // pred_fallthru
      _
    // Predicated region
    $region14: #{tpu_custom_call.1} parent=1 // pred_check
      _
    $region15: #{tpu_custom_call.1} parent=1 // pred_check_branch
      %40 = sbr.rel (0) target = $region17
    $region16: #{tpu_custom_call.1} parent=1 // pred_region
      _
    $region17: #{tpu_custom_call.1} parent=1 // pred_fallthru
      _
    // Predicated region
    $region18: #{tpu_custom_call.1} parent=1 // pred_check
      _
    $region19: #{tpu_custom_call.1} parent=1 // pred_check_branch
      %42 = sbr.rel (0) target = $region21
    $region20: #{tpu_custom_call.1} parent=1 // pred_region
      %s44 = ssub.s32 512, 512
      %45 = vsyncadd [#allocation7], %s44
      %s46 = sshll.u32 [#allocation8], 4
      %s47 = int_to_ptr.vmem [resolvable:$true] %s46
      %52 = dma.hbm_to_vmem [thread:$0]  %s4, 512, %s47, [#allocation7], 64, 64, 4
    $region21: #{tpu_custom_call.1} parent=1 // pred_fallthru
      _
    // Predicated region
    $region22: #{tpu_custom_call.1} parent=1 // pred_check
      _
    $region23: #{tpu_custom_call.1} parent=1 // pred_check_branch
      %54 = sbr.rel (0) target = $region25
    $region24: #{tpu_custom_call.1} parent=1 // pred_region
      %55 = dma.done [#allocation4], 512
    $region25: #{tpu_custom_call.1} parent=1 // pred_fallthru
      _
    // Predicated region
    $region26: #{tpu_custom_call.1} parent=1 // pred_check
      _
    $region27: #{tpu_custom_call.1} parent=1 // pred_check_branch
      %57 = sbr.rel (0) target = $region29
    $region28: #{tpu_custom_call.1} parent=1 // pred_region
      %58 = dma.done [#allocation7], 256
    $region29: #{tpu_custom_call.1} parent=1 // pred_fallthru
      _
    // Predicated region
    $region30: #{tpu_custom_call.1} parent=1 // pred_check
      _
    $region31: #{tpu_custom_call.1} parent=1 // pred_check_branch
      %60 = sbr.rel (0) target = $region33
    $region32: #{tpu_custom_call.1} parent=1 // pred_region
      %61 = dma.done [#allocation7], 512
    $region33: #{tpu_custom_call.1} parent=1 // pred_fallthru
      _
    %v63 = vld [vmem:[#allocation3] sm:$0xf]
    %v64 = vld [vmem:[#allocation3 + $0x4] sm:$0xf]
    %v65 = vld [vmem:[#allocation3 + $0x8] sm:$0xf]
    %v66 = vld [vmem:[#allocation3 + $0xc] sm:$0xf]
    %v67 = vld [vmem:[#allocation3 + $0x10] sm:$0xf]
    %v68 = vld [vmem:[#allocation3 + $0x14] sm:$0xf]
    %v69 = vld [vmem:[#allocation3 + $0x18] sm:$0xf]
    %v70 = vld [vmem:[#allocation3 + $0x1c] sm:$0xf]
    %v71 = vld [vmem:[#allocation6] sm:$0xff]
    %v72 = vld [vmem:[#allocation6 + $0x8] sm:$0xff]
    %v73 = vld [vmem:[%s3] sm:$0x3]
    %v75 = vlaneseq
    %v76 = vshrl.u32 %v75, 7
    %v77 = vsub.s32 0, %v76
    %v78 = vrot.slane %v73, %v77
    %v79 = vlaneseq
    %v80 = vshrl.u32 %v79, 7
    %v81 = vsub.s32 1, %v80
    %v82 = vrot.slane %v73, %v81
    %v93 = vunpack.c.l.b16 %v63
    %v94 = vunpack.c.l.b16 %v64
    %v95 = vunpack.c.l.b16 %v65
    %v96 = vunpack.c.l.b16 %v66
    %v97 = vunpack.c.l.b16 %v67
    %v98 = vunpack.c.l.b16 %v68
    %v99 = vunpack.c.l.b16 %v69
    %v100 = vunpack.c.l.b16 %v70
    %v101 = vpack.c.b16 %v94, %v93
    %v102 = vpack.c.b16 %v96, %v95
    %v103 = vpack.c.b16 %v98, %v97
    %v104 = vpack.c.b16 %v100, %v99
    %v107 = vunpack.c.l.b16 %v71
    %v108 = vunpack.c.h.b16 %v71
    %v109 = vunpack.c.l.b16 %v72
    %v110 = vunpack.c.h.b16 %v72
    %v111 = vpack.c.b16 %v109, %v107
    %v112 = vpack.c.b16 %v110, %v108
    %vm115 = vcmask 130048
    %v117 = vsel %vm115, %v101, 0
    %v120 = vsel %vm115, %v102, 0
    %v123 = vsel %vm115, %v103, 0
    %v126 = vsel %vm115, %v104, 0
    %128 = vmatprep.subr.bf16.mxu0 0
    %129 = vmatpush1.bf16.msra.mxu0 0
    %130 = vmatprep.subr.bf16.mxu0 0
    %131 = vmatpush1.bf16.msra.mxu0 0
    %132 = vmatprep.subr.bf16.mxu0 0
    %133 = vmatpush1.bf16.msra.mxu0 0
    %134 = vmatprep.subr.bf16.mxu0 0
    %135 = vmatpush1.bf16.msra.mxu0 0
    %136 = vmatprep.subr.bf16.mxu0 0
    %137 = vmatpush1.bf16.msra.mxu0 0
    %138 = vmatprep.subr.bf16.mxu0 0
    %139 = vmatpush1.bf16.msra.mxu0 0
    %140 = vmatprep.subr.bf16.mxu0 0
    %141 = vmatpush1.bf16.msra.mxu0 0
    %142 = vmatprep.subr.bf16.mxu0 %v112
    %143 = vmatpush1.bf16.msra.mxu0 %v111
    %144 = vmatprep.subr.bf16.mxu0 0
    %145 = vmatpush2.bf16.msra.mxu0 0
    %146 = vmatprep.subr.bf16.mxu0 0
    %147 = vmatpush2.bf16.msra.mxu0 0
    %148 = vmatprep.subr.bf16.mxu0 0
    %149 = vmatpush2.bf16.msra.mxu0 0
    %150 = vmatprep.subr.bf16.mxu0 0
    %151 = vmatpush2.bf16.msra.mxu0 0
    %152 = vmatprep.subr.bf16.mxu0 0
    %153 = vmatpush2.bf16.msra.mxu0 0
    %154 = vmatprep.subr.bf16.mxu0 0
    %155 = vmatpush2.bf16.msra.mxu0 0
    %156 = vmatprep.subr.bf16.mxu0 0
    %157 = vmatpush2.bf16.msra.mxu0 0
    %158 = vmatprep.subr.bf16.mxu0 0
    %159 = vmatpush2.bf16.msra.mxu0 0
    %160 = vmatprep.mubr.bf16.mxu0 0
    %161 = vmatmul.mubr.bf16.gmra.mxu0 %v117
    %v162 = vpop.f32.mrf.mxu0
    %v163 = vadd.f32 %v78, %v162
    %v164 = vpop.f32.mrf.mxu0
    %v165 = vadd.f32 %v82, %v164
    %v166 = vpop.f32.mrf.mxu0
    %v167 = vadd.f32 %v78, %v166
    %v168 = vpop.f32.mrf.mxu0
    %v169 = vadd.f32 %v82, %v168
    %170 = vmatprep.mubr.bf16.mxu0 0
    %171 = vmatmul.mubr.bf16.gmra.mxu0 %v120
    %v172 = vpop.f32.mrf.mxu0
    %v173 = vadd.f32 %v78, %v172
    %v174 = vpop.f32.mrf.mxu0
    %v175 = vadd.f32 %v82, %v174
    %v176 = vpop.f32.mrf.mxu0
    %v177 = vadd.f32 %v78, %v176
    %v178 = vpop.f32.mrf.mxu0
    %v179 = vadd.f32 %v82, %v178
    %180 = vmatprep.mubr.bf16.mxu0 0
    %181 = vmatmul.mubr.bf16.gmra.mxu0 %v123
    %v182 = vpop.f32.mrf.mxu0
    %v183 = vadd.f32 %v78, %v182
    %v184 = vpop.f32.mrf.mxu0
    %v185 = vadd.f32 %v82, %v184
    %v186 = vpop.f32.mrf.mxu0
    %v187 = vadd.f32 %v78, %v186
    %v188 = vpop.f32.mrf.mxu0
    %v189 = vadd.f32 %v82, %v188
    %190 = vmatprep.mubr.bf16.mxu0 0
    %191 = vmatmul.mubr.bf16.gmra.mxu0 %v126
    %v192 = vpop.f32.mrf.mxu0
    %v193 = vadd.f32 %v78, %v192
    %v194 = vpop.f32.mrf.mxu0
    %v195 = vadd.f32 %v82, %v194
    %v196 = vpop.f32.mrf.mxu0
    %v197 = vadd.f32 %v78, %v196
    %v198 = vpop.f32.mrf.mxu0
    %v199 = vadd.f32 %v82, %v198
    %200 = vdwg.mxu0
    %v201 = vpack.c.bf16 %v163, %v163
    %v202 = vpack.c.bf16 %v165, %v165
    %v203 = vpack.c.bf16 %v167, %v167
    %v204 = vpack.c.bf16 %v169, %v169
    %v205 = vpack.c.bf16 %v173, %v173
    %v206 = vpack.c.bf16 %v175, %v175
    %v207 = vpack.c.bf16 %v177, %v177
    %v208 = vpack.c.bf16 %v179, %v179
    %v209 = vpack.c.bf16 %v183, %v183
    %v210 = vpack.c.bf16 %v185, %v185
    %v211 = vpack.c.bf16 %v187, %v187
    %v212 = vpack.c.bf16 %v189, %v189
    %v213 = vpack.c.bf16 %v193, %v193
    %v214 = vpack.c.bf16 %v195, %v195
    %v215 = vpack.c.bf16 %v197, %v197
    %v216 = vpack.c.bf16 %v199, %v199
    %v233 = vunpack.c.l.b16 %v201
    %v234 = vunpack.c.l.b16 %v202
    %v235 = vunpack.c.l.b16 %v203
    %v236 = vunpack.c.l.b16 %v204
    %v237 = vunpack.c.l.b16 %v205
    %v238 = vunpack.c.l.b16 %v206
    %v239 = vunpack.c.l.b16 %v207
    %v240 = vunpack.c.l.b16 %v208
    %v241 = vunpack.c.l.b16 %v209
    %v242 = vunpack.c.l.b16 %v210
    %v243 = vunpack.c.l.b16 %v211
    %v244 = vunpack.c.l.b16 %v212
    %v245 = vunpack.c.l.b16 %v213
    %v246 = vunpack.c.l.b16 %v214
    %v247 = vunpack.c.l.b16 %v215
    %v248 = vunpack.c.l.b16 %v216
    %v249 = vpack.c.b16 %v234, %v233
    %v250 = vpack.c.b16 %v236, %v235
    %v251 = vpack.c.b16 %v238, %v237
    %v252 = vpack.c.b16 %v240, %v239
    %v253 = vpack.c.b16 %v242, %v241
    %v254 = vpack.c.b16 %v244, %v243
    %v255 = vpack.c.b16 %v246, %v245
    %v256 = vpack.c.b16 %v248, %v247
    %265 = vst [vmem:[#allocation2] sm:$0xff] %v249
    %266 = vst [vmem:[#allocation2 + $0x8] sm:$0xff] %v250
    %267 = vst [vmem:[#allocation2 + $0x10] sm:$0xff] %v251
    %268 = vst [vmem:[#allocation2 + $0x18] sm:$0xff] %v252
    %269 = vst [vmem:[#allocation2 + $0x20] sm:$0xff] %v253
    %270 = vst [vmem:[#allocation2 + $0x28] sm:$0xff] %v254
    %271 = vst [vmem:[#allocation2 + $0x30] sm:$0xff] %v255
    %272 = vst [vmem:[#allocation2 + $0x38] sm:$0xff] %v256
    %v273 = vld [vmem:[%s0] sm:$0xff]
    %v274 = vld [vmem:[#allocation8] sm:$0xf]
    %v275 = vld [vmem:[#allocation8 + $0x4] sm:$0xf]
    %v276 = vld [vmem:[#allocation8 + $0x8] sm:$0xf]
    %v277 = vld [vmem:[#allocation8 + $0xc] sm:$0xf]
    %v278 = vld [vmem:[#allocation8 + $0x10] sm:$0xf]
    %v279 = vld [vmem:[#allocation8 + $0x14] sm:$0xf]
    %v280 = vld [vmem:[#allocation8 + $0x18] sm:$0xf]
    %v281 = vld [vmem:[#allocation8 + $0x1c] sm:$0xf]
    %v282 = vld [vmem:[#allocation2] sm:$0xf]
    %v283 = vunpack.c.l.bf16 %v282
    %v288 = vunpack.c.l.b16 %v274
    %v289 = vunpack.c.l.b16 %v275
    %v290 = vunpack.c.l.b16 %v276
    %v291 = vunpack.c.l.b16 %v277
    %v292 = vpack.c.b16 %v289, %v288
    %v293 = vpack.c.b16 %v291, %v290
    %vm296 = vcmask 261120
    %v298 = vsel %vm296, 0, 0
    %300 = vmatprep.subr.bf16.mxu0 0
    %301 = vmatpush1.bf16.msra.mxu0 0
    %302 = vmatprep.subr.bf16.mxu0 0
    %303 = vmatpush1.bf16.msra.mxu0 0
    %304 = vmatprep.subr.bf16.mxu0 0
    %305 = vmatpush1.bf16.msra.mxu0 0
    %306 = vmatprep.subr.bf16.mxu0 0
    %307 = vmatpush1.bf16.msra.mxu0 0
    %308 = vmatprep.subr.bf16.mxu0 0
    %309 = vmatpush1.bf16.msra.mxu0 0
    %310 = vmatprep.subr.bf16.mxu0 0
    %311 = vmatpush1.bf16.msra.mxu0 0
    %312 = vmatprep.subr.bf16.mxu0 0
    %313 = vmatpush1.bf16.msra.mxu0 %v293
    %314 = vmatprep.subr.bf16.mxu0 0
    %315 = vmatpush1.bf16.msra.mxu0 %v292
    %316 = vmatprep.subr.bf16.mxu0 0
    %317 = vmatpush2.bf16.msra.mxu0 0
    %318 = vmatprep.subr.bf16.mxu0 0
    %319 = vmatpush2.bf16.msra.mxu0 0
    %320 = vmatprep.subr.bf16.mxu0 0
    %321 = vmatpush2.bf16.msra.mxu0 0
    %322 = vmatprep.subr.bf16.mxu0 0
    %323 = vmatpush2.bf16.msra.mxu0 0
    %324 = vmatprep.subr.bf16.mxu0 0
    %325 = vmatpush2.bf16.msra.mxu0 0
    %326 = vmatprep.subr.bf16.mxu0 0
    %327 = vmatpush2.bf16.msra.mxu0 0
    %328 = vmatprep.subr.bf16.mxu0 0
    %329 = vmatpush2.bf16.msra.mxu0 0
    %330 = vmatprep.subr.bf16.mxu0 0
    %331 = vmatpush2.bf16.msra.mxu0 0
    %332 = vmatprep.mubr.bf16.mxu0 0
    %333 = vmatmul.mubr.bf16.gmra.mxu0 %v298
    %v334 = vpop.f32.mrf.mxu0
    %v335 = vadd.f32 %v283, %v334
    %v336 = vpop.f32.mrf.mxu0
    %v337 = vpop.f32.mrf.mxu0
    %v338 = vpop.f32.mrf.mxu0
    %339 = vdwg.mxu0
    %s340 = scalar_lea.vmem [#allocation2], 56
    %v341 = vld [vmem:[%s340 + $0x4] sm:$0xf]
    %v342 = vunpack.c.l.bf16 %v341
    %v347 = vunpack.c.l.b16 %v278
    %v348 = vunpack.c.l.b16 %v279
    %v349 = vunpack.c.l.b16 %v280
    %v350 = vunpack.c.l.b16 %v281
    %v351 = vpack.c.b16 %v348, %v347
    %v352 = vpack.c.b16 %v350, %v349
    %355 = vmatprep.subr.bf16.mxu0 0
    %356 = vmatpush1.bf16.msra.mxu0 0
    %357 = vmatprep.subr.bf16.mxu0 0
    %358 = vmatpush1.bf16.msra.mxu0 0
    %359 = vmatprep.subr.bf16.mxu0 0
    %360 = vmatpush1.bf16.msra.mxu0 0
    %361 = vmatprep.subr.bf16.mxu0 0
    %362 = vmatpush1.bf16.msra.mxu0 0
    %363 = vmatprep.subr.bf16.mxu0 0
    %364 = vmatpush1.bf16.msra.mxu0 0
    %365 = vmatprep.subr.bf16.mxu0 0
    %366 = vmatpush1.bf16.msra.mxu0 0
    %367 = vmatprep.subr.bf16.mxu0 0
    %368 = vmatpush1.bf16.msra.mxu0 %v352
    %369 = vmatprep.subr.bf16.mxu0 0
    %370 = vmatpush1.bf16.msra.mxu0 %v351
    %371 = vmatprep.subr.bf16.mxu0 0
    %372 = vmatpush2.bf16.msra.mxu0 0
    %373 = vmatprep.subr.bf16.mxu0 0
    %374 = vmatpush2.bf16.msra.mxu0 0
    %375 = vmatprep.subr.bf16.mxu0 0
    %376 = vmatpush2.bf16.msra.mxu0 0
    %377 = vmatprep.subr.bf16.mxu0 0
    %378 = vmatpush2.bf16.msra.mxu0 0
    %379 = vmatprep.subr.bf16.mxu0 0
    %380 = vmatpush2.bf16.msra.mxu0 0
    %381 = vmatprep.subr.bf16.mxu0 0
    %382 = vmatpush2.bf16.msra.mxu0 0
    %383 = vmatprep.subr.bf16.mxu0 0
    %384 = vmatpush2.bf16.msra.mxu0 0
    %385 = vmatprep.subr.bf16.mxu0 0
    %386 = vmatpush2.bf16.msra.mxu0 0
    %387 = vmatprep.mubr.bf16.mxu0 0
    %388 = vmatmul.mubr.bf16.gmra.mxu0 %v298
    %v389 = vpop.f32.mrf.mxu0
    %v390 = vadd.f32 %v342, %v389
    %v391 = vpop.f32.mrf.mxu0
    %v392 = vpop.f32.mrf.mxu0
    %v393 = vpop.f32.mrf.mxu0
    %394 = vdwg.mxu0
    %vm395 = vcmp.gt.s32.totalorder %v273, 0
    %v396 = vxor.u32 %v335, 2147483648
    %v397 = vmul.f32 %v396, 1.442695
    %v398 = vpow.pop %v397
    %v399 = vadd.f32 %v398, 1.0
    %v400 = vrcp.pop %v399
    %v401 = vmul.f32 1.0, %v400
    %v402 = vtanh.pop %v335
    %v403 = vmul.f32 %v401, 0.0
    %405 = vrot.lane.b32.xlu0 %v402, 32
    %v406 = vpop.permute.xlu0 %405
    %v408 = vmul.f32 %v401, %v406
    %410 = vrot.lane.b32.xlu0 %v408, 32
    %v411 = vpop.permute.xlu0 %410
    %v413 = vadd.f32 %v403, %v411
    %v414 = vtanh.pop %v413
    %416 = vrot.lane.b32.xlu0 %v414, 32
    %v417 = vpop.permute.xlu0 %416
    %v419 = vmul.f32 %v401, %v417
    %v420 = vsel %vm395, 1, 0
    %421 = vset.pattern.permute.xlu0 0
    %422 = vperm.xlu0 %421, %v420
    %v423 = vpop.permute.xlu0 %422
    %vm424 = vcmp.eq.s32.totalorder %v423, 1
    %v425 = vsel %vm424, %v419, 0.0
    %v426 = vsel %vm424, %v413, 0.0
    %vm427 = vcmp.gt.s32.totalorder %v273, 7
    %v428 = vxor.u32 %v390, 2147483648
    %v429 = vmul.f32 %v428, 1.442695
    %v430 = vpow.pop %v429
    %v431 = vadd.f32 %v430, 1.0
    %v432 = vrcp.pop %v431
    %v433 = vmul.f32 1.0, %v432
    %v434 = vtanh.pop %v390
    %v435 = vmul.f32 %v433, 0.0
    %437 = vrot.lane.b32.xlu0 %v434, 32
    %v438 = vpop.permute.xlu0 %437
    %v440 = vmul.f32 %v433, %v438
    %442 = vrot.lane.b32.xlu0 %v440, 32
    %v443 = vpop.permute.xlu0 %442
    %v445 = vadd.f32 %v435, %v443
    %v446 = vtanh.pop %v445
    %448 = vrot.lane.b32.xlu0 %v446, 32
    %v449 = vpop.permute.xlu0 %448
    %v451 = vmul.f32 %v433, %v449
    %v452 = vsel %vm427, 1, 0
    %453 = vset.pattern.permute.xlu0 0
    %454 = vperm.xlu0 %453, %v452
    %v455 = vpop.permute.xlu0 %454
    %vm456 = vcmp.eq.s32.totalorder %v455, 1
    %v457 = vsel %vm456, %v451, 0.0
    %v458 = vsel %vm456, %v445, 0.0
    %v459 = vpack.c.bf16 %v425, %v425
    %s460 = scalar_lea.vmem [#allocation2], 8
    %v461 = vld [vmem:[%s460] sm:$0xf]
    %v462 = vunpack.c.l.bf16 %v461
    %464 = vrot.lane.b32.xlu0 %v459, 64
    %v465 = vpop.permute.xlu0 %464
    %v467 = vsel %vm296, %v465, 0
    %469 = vmatprep.subr.bf16.mxu0 0
    %470 = vmatpush1.bf16.msra.mxu0 0
    %471 = vmatprep.subr.bf16.mxu0 0
    %472 = vmatpush1.bf16.msra.mxu0 0
    %473 = vmatprep.subr.bf16.mxu0 0
    %474 = vmatpush1.bf16.msra.mxu0 0
    %475 = vmatprep.subr.bf16.mxu0 0
    %476 = vmatpush1.bf16.msra.mxu0 0
    %477 = vmatprep.subr.bf16.mxu0 0
    %478 = vmatpush1.bf16.msra.mxu0 0
    %479 = vmatprep.subr.bf16.mxu0 0
    %480 = vmatpush1.bf16.msra.mxu0 0
    %481 = vmatprep.subr.bf16.mxu0 0
    %482 = vmatpush1.bf16.msra.mxu0 %v293
    %483 = vmatprep.subr.bf16.mxu0 0
    %484 = vmatpush1.bf16.msra.mxu0 %v292
    %485 = vmatprep.subr.bf16.mxu0 0
    %486 = vmatpush2.bf16.msra.mxu0 0
    %487 = vmatprep.subr.bf16.mxu0 0
    %488 = vmatpush2.bf16.msra.mxu0 0
    %489 = vmatprep.subr.bf16.mxu0 0
    %490 = vmatpush2.bf16.msra.mxu0 0
    %491 = vmatprep.subr.bf16.mxu0 0
    %492 = vmatpush2.bf16.msra.mxu0 0
    %493 = vmatprep.subr.bf16.mxu0 0
    %494 = vmatpush2.bf16.msra.mxu0 0
    %495 = vmatprep.subr.bf16.mxu0 0
    %496 = vmatpush2.bf16.msra.mxu0 0
    %497 = vmatprep.subr.bf16.mxu0 0
    %498 = vmatpush2.bf16.msra.mxu0 0
    %499 = vmatprep.subr.bf16.mxu0 0
    %500 = vmatpush2.bf16.msra.mxu0 0
    %501 = vmatprep.mubr.bf16.mxu0 0
    %502 = vmatmul.mubr.bf16.gmra.mxu0 %v467
    %v503 = vpop.f32.mrf.mxu0
    %v504 = vadd.f32 %v462, %v503
    %v505 = vpop.f32.mrf.mxu0
    %v506 = vpop.f32.mrf.mxu0
    %v507 = vpop.f32.mrf.mxu0
    %508 = vdwg.mxu0
    %v509 = vpack.c.bf16 %v457, %v457
    %s510 = scalar_lea.vmem [#allocation2], 48
    %v511 = vld [vmem:[%s510 + $0x4] sm:$0xf]
    %v512 = vunpack.c.l.bf16 %v511
    %514 = vrot.lane.b32.xlu0 %v509, 64
    %v515 = vpop.permute.xlu0 %514
    %v517 = vsel %vm296, %v515, 0
    %519 = vmatprep.subr.bf16.mxu0 0
    %520 = vmatpush1.bf16.msra.mxu0 0
    %521 = vmatprep.subr.bf16.mxu0 0
    %522 = vmatpush1.bf16.msra.mxu0 0
    %523 = vmatprep.subr.bf16.mxu0 0
    %524 = vmatpush1.bf16.msra.mxu0 0
    %525 = vmatprep.subr.bf16.mxu0 0
    %526 = vmatpush1.bf16.msra.mxu0 0
    %527 = vmatprep.subr.bf16.mxu0 0
    %528 = vmatpush1.bf16.msra.mxu0 0
    %529 = vmatprep.subr.bf16.mxu0 0
    %530 = vmatpush1.bf16.msra.mxu0 0
    %531 = vmatprep.subr.bf16.mxu0 0
    %532 = vmatpush1.bf16.msra.mxu0 %v352
    %533 = vmatprep.subr.bf16.mxu0 0
    %534 = vmatpush1.bf16.msra.mxu0 %v351
    %535 = vmatprep.subr.bf16.mxu0 0
    %536 = vmatpush2.bf16.msra.mxu0 0
    %537 = vmatprep.subr.bf16.mxu0 0
    %538 = vmatpush2.bf16.msra.mxu0 0
    %539 = vmatprep.subr.bf16.mxu0 0
    %540 = vmatpush2.bf16.msra.mxu0 0
    %541 = vmatprep.subr.bf16.mxu0 0
    %542 = vmatpush2.bf16.msra.mxu0 0
    %543 = vmatprep.subr.bf16.mxu0 0
    %544 = vmatpush2.bf16.msra.mxu0 0
    %545 = vmatprep.subr.bf16.mxu0 0
    %546 = vmatpush2.bf16.msra.mxu0 0
    %547 = vmatprep.subr.bf16.mxu0 0
    %548 = vmatpush2.bf16.msra.mxu0 0
    %549 = vmatprep.subr.bf16.mxu0 0
    %550 = vmatpush2.bf16.msra.mxu0 0
    %551 = vmatprep.mubr.bf16.mxu0 0
    %552 = vmatmul.mubr.bf16.gmra.mxu0 %v517
    %v553 = vpop.f32.mrf.mxu0
    %v554 = vadd.f32 %v512, %v553
    %v555 = vpop.f32.mrf.mxu0
    %v556 = vpop.f32.mrf.mxu0
    %v557 = vpop.f32.mrf.mxu0
    %558 = vdwg.mxu0
    %vm559 = vcmp.gt.s32.totalorder %v273, 1
    %v560 = vxor.u32 %v504, 2147483648
    %v561 = vmul.f32 %v560, 1.442695
    %v562 = vpow.pop %v561
    %v563 = vadd.f32 %v562, 1.0
    %v564 = vrcp.pop %v563
    %v565 = vmul.f32 1.0, %v564
    %v566 = vtanh.pop %v504
    %v567 = vmul.f32 %v565, %v426
    %569 = vrot.lane.b32.xlu0 %v566, 32
    %v570 = vpop.permute.xlu0 %569
    %v572 = vmul.f32 %v565, %v570
    %574 = vrot.lane.b32.xlu0 %v572, 32
    %v575 = vpop.permute.xlu0 %574
    %v577 = vadd.f32 %v567, %v575
    %v578 = vtanh.pop %v577
    %580 = vrot.lane.b32.xlu0 %v578, 32
    %v581 = vpop.permute.xlu0 %580
    %v583 = vmul.f32 %v565, %v581
    %v584 = vsel %vm559, 1, 0
    %585 = vset.pattern.permute.xlu0 0
    %586 = vperm.xlu0 %585, %v584
    %v587 = vpop.permute.xlu0 %586
    %vm588 = vcmp.eq.s32.totalorder %v587, 1
    %v589 = vsel %vm588, %v583, %v425
    %v590 = vsel %vm588, %v577, %v426
    %vm591 = vcmp.gt.s32.totalorder %v273, 6
    %v592 = vxor.u32 %v554, 2147483648
    %v593 = vmul.f32 %v592, 1.442695
    %v594 = vpow.pop %v593
    %v595 = vadd.f32 %v594, 1.0
    %v596 = vrcp.pop %v595
    %v597 = vmul.f32 1.0, %v596
    %v598 = vtanh.pop %v554
    %v599 = vmul.f32 %v597, %v458
    %601 = vrot.lane.b32.xlu0 %v598, 32
    %v602 = vpop.permute.xlu0 %601
    %v604 = vmul.f32 %v597, %v602
    %606 = vrot.lane.b32.xlu0 %v604, 32
    %v607 = vpop.permute.xlu0 %606
    %v609 = vadd.f32 %v599, %v607
    %v610 = vtanh.pop %v609
    %612 = vrot.lane.b32.xlu0 %v610, 32
    %v613 = vpop.permute.xlu0 %612
    %v615 = vmul.f32 %v597, %v613
    %v616 = vsel %vm591, 1, 0
    %617 = vset.pattern.permute.xlu0 0
    %618 = vperm.xlu0 %617, %v616
    %v619 = vpop.permute.xlu0 %618
    %vm620 = vcmp.eq.s32.totalorder %v619, 1
    %v621 = vsel %vm620, %v615, %v457
    %v622 = vsel %vm620, %v609, %v458
    %v623 = vpack.c.bf16 %v589, %v589
    %s624 = scalar_lea.vmem [#allocation2], 16
    %v625 = vld [vmem:[%s624] sm:$0xf]
    %v626 = vunpack.c.l.bf16 %v625
    %628 = vrot.lane.b32.xlu0 %v623, 64
    %v629 = vpop.permute.xlu0 %628
    %v631 = vsel %vm296, %v629, 0
    %633 = vmatprep.subr.bf16.mxu0 0
    %634 = vmatpush1.bf16.msra.mxu0 0
    %635 = vmatprep.subr.bf16.mxu0 0
    %636 = vmatpush1.bf16.msra.mxu0 0
    %637 = vmatprep.subr.bf16.mxu0 0
    %638 = vmatpush1.bf16.msra.mxu0 0
    %639 = vmatprep.subr.bf16.mxu0 0
    %640 = vmatpush1.bf16.msra.mxu0 0
    %641 = vmatprep.subr.bf16.mxu0 0
    %642 = vmatpush1.bf16.msra.mxu0 0
    %643 = vmatprep.subr.bf16.mxu0 0
    %644 = vmatpush1.bf16.msra.mxu0 0
    %645 = vmatprep.subr.bf16.mxu0 0
    %646 = vmatpush1.bf16.msra.mxu0 %v293
    %647 = vmatprep.subr.bf16.mxu0 0
    %648 = vmatpush1.bf16.msra.mxu0 %v292
    %649 = vmatprep.subr.bf16.mxu0 0
    %650 = vmatpush2.bf16.msra.mxu0 0
    %651 = vmatprep.subr.bf16.mxu0 0
    %652 = vmatpush2.bf16.msra.mxu0 0
    %653 = vmatprep.subr.bf16.mxu0 0
    %654 = vmatpush2.bf16.msra.mxu0 0
    %655 = vmatprep.subr.bf16.mxu0 0
    %656 = vmatpush2.bf16.msra.mxu0 0
    %657 = vmatprep.subr.bf16.mxu0 0
    %658 = vmatpush2.bf16.msra.mxu0 0
    %659 = vmatprep.subr.bf16.mxu0 0
    %660 = vmatpush2.bf16.msra.mxu0 0
    %661 = vmatprep.subr.bf16.mxu0 0
    %662 = vmatpush2.bf16.msra.mxu0 0
    %663 = vmatprep.subr.bf16.mxu0 0
    %664 = vmatpush2.bf16.msra.mxu0 0
    %665 = vmatprep.mubr.bf16.mxu0 0
    %666 = vmatmul.mubr.bf16.gmra.mxu0 %v631
    %v667 = vpop.f32.mrf.mxu0
    %v668 = vadd.f32 %v626, %v667
    %v669 = vpop.f32.mrf.mxu0
    %v670 = vpop.f32.mrf.mxu0
    %v671 = vpop.f32.mrf.mxu0
    %672 = vdwg.mxu0
    %v673 = vpack.c.bf16 %v621, %v621
    %s674 = scalar_lea.vmem [#allocation2], 40
    %v675 = vld [vmem:[%s674 + $0x4] sm:$0xf]
    %v676 = vunpack.c.l.bf16 %v675
    %678 = vrot.lane.b32.xlu0 %v673, 64
    %v679 = vpop.permute.xlu0 %678
    %v681 = vsel %vm296, %v679, 0
    %683 = vmatprep.subr.bf16.mxu0 0
    %684 = vmatpush1.bf16.msra.mxu0 0
    %685 = vmatprep.subr.bf16.mxu0 0
    %686 = vmatpush1.bf16.msra.mxu0 0
    %687 = vmatprep.subr.bf16.mxu0 0
    %688 = vmatpush1.bf16.msra.mxu0 0
    %689 = vmatprep.subr.bf16.mxu0 0
    %690 = vmatpush1.bf16.msra.mxu0 0
    %691 = vmatprep.subr.bf16.mxu0 0
    %692 = vmatpush1.bf16.msra.mxu0 0
    %693 = vmatprep.subr.bf16.mxu0 0
    %694 = vmatpush1.bf16.msra.mxu0 0
    %695 = vmatprep.subr.bf16.mxu0 0
    %696 = vmatpush1.bf16.msra.mxu0 %v352
    %697 = vmatprep.subr.bf16.mxu0 0
    %698 = vmatpush1.bf16.msra.mxu0 %v351
    %699 = vmatprep.subr.bf16.mxu0 0
    %700 = vmatpush2.bf16.msra.mxu0 0
    %701 = vmatprep.subr.bf16.mxu0 0
    %702 = vmatpush2.bf16.msra.mxu0 0
    %703 = vmatprep.subr.bf16.mxu0 0
    %704 = vmatpush2.bf16.msra.mxu0 0
    %705 = vmatprep.subr.bf16.mxu0 0
    %706 = vmatpush2.bf16.msra.mxu0 0
    %707 = vmatprep.subr.bf16.mxu0 0
    %708 = vmatpush2.bf16.msra.mxu0 0
    %709 = vmatprep.subr.bf16.mxu0 0
    %710 = vmatpush2.bf16.msra.mxu0 0
    %711 = vmatprep.subr.bf16.mxu0 0
    %712 = vmatpush2.bf16.msra.mxu0 0
    %713 = vmatprep.subr.bf16.mxu0 0
    %714 = vmatpush2.bf16.msra.mxu0 0
    %715 = vmatprep.mubr.bf16.mxu0 0
    %716 = vmatmul.mubr.bf16.gmra.mxu0 %v681
    %v717 = vpop.f32.mrf.mxu0
    %v718 = vadd.f32 %v676, %v717
    %v719 = vpop.f32.mrf.mxu0
    %v720 = vpop.f32.mrf.mxu0
    %v721 = vpop.f32.mrf.mxu0
    %722 = vdwg.mxu0
    %vm723 = vcmp.gt.s32.totalorder %v273, 2
    %v724 = vxor.u32 %v668, 2147483648
    %v725 = vmul.f32 %v724, 1.442695
    %v726 = vpow.pop %v725
    %v727 = vadd.f32 %v726, 1.0
    %v728 = vrcp.pop %v727
    %v729 = vmul.f32 1.0, %v728
    %v730 = vtanh.pop %v668
    %v731 = vmul.f32 %v729, %v590
    %733 = vrot.lane.b32.xlu0 %v730, 32
    %v734 = vpop.permute.xlu0 %733
    %v736 = vmul.f32 %v729, %v734
    %738 = vrot.lane.b32.xlu0 %v736, 32
    %v739 = vpop.permute.xlu0 %738
    %v741 = vadd.f32 %v731, %v739
    %v742 = vtanh.pop %v741
    %744 = vrot.lane.b32.xlu0 %v742, 32
    %v745 = vpop.permute.xlu0 %744
    %v747 = vmul.f32 %v729, %v745
    %v748 = vsel %vm723, 1, 0
    %749 = vset.pattern.permute.xlu0 0
    %750 = vperm.xlu0 %749, %v748
    %v751 = vpop.permute.xlu0 %750
    %vm752 = vcmp.eq.s32.totalorder %v751, 1
    %v753 = vsel %vm752, %v747, %v589
    %v754 = vsel %vm752, %v741, %v590
    %vm755 = vcmp.gt.s32.totalorder %v273, 5
    %v756 = vxor.u32 %v718, 2147483648
    %v757 = vmul.f32 %v756, 1.442695
    %v758 = vpow.pop %v757
    %v759 = vadd.f32 %v758, 1.0
    %v760 = vrcp.pop %v759
    %v761 = vmul.f32 1.0, %v760
    %v762 = vtanh.pop %v718
    %v763 = vmul.f32 %v761, %v622
    %765 = vrot.lane.b32.xlu0 %v762, 32
    %v766 = vpop.permute.xlu0 %765
    %v768 = vmul.f32 %v761, %v766
    %770 = vrot.lane.b32.xlu0 %v768, 32
    %v771 = vpop.permute.xlu0 %770
    %v773 = vadd.f32 %v763, %v771
    %v774 = vtanh.pop %v773
    %776 = vrot.lane.b32.xlu0 %v774, 32
    %v777 = vpop.permute.xlu0 %776
    %v779 = vmul.f32 %v761, %v777
    %v780 = vsel %vm755, 1, 0
    %781 = vset.pattern.permute.xlu0 0
    %782 = vperm.xlu0 %781, %v780
    %v783 = vpop.permute.xlu0 %782
    %vm784 = vcmp.eq.s32.totalorder %v783, 1
    %v785 = vsel %vm784, %v779, %v621
    %v786 = vsel %vm784, %v773, %v622
    %v787 = vpack.c.bf16 %v753, %v753
    %s788 = scalar_lea.vmem [#allocation2], 24
    %v789 = vld [vmem:[%s788] sm:$0xf]
    %v790 = vunpack.c.l.bf16 %v789
    %792 = vrot.lane.b32.xlu0 %v787, 64
    %v793 = vpop.permute.xlu0 %792
    %v795 = vsel %vm296, %v793, 0
    %797 = vmatprep.subr.bf16.mxu0 0
    %798 = vmatpush1.bf16.msra.mxu0 0
    %799 = vmatprep.subr.bf16.mxu0 0
    %800 = vmatpush1.bf16.msra.mxu0 0
    %801 = vmatprep.subr.bf16.mxu0 0
    %802 = vmatpush1.bf16.msra.mxu0 0
    %803 = vmatprep.subr.bf16.mxu0 0
    %804 = vmatpush1.bf16.msra.mxu0 0
    %805 = vmatprep.subr.bf16.mxu0 0
    %806 = vmatpush1.bf16.msra.mxu0 0
    %807 = vmatprep.subr.bf16.mxu0 0
    %808 = vmatpush1.bf16.msra.mxu0 0
    %809 = vmatprep.subr.bf16.mxu0 0
    %810 = vmatpush1.bf16.msra.mxu0 %v293
    %811 = vmatprep.subr.bf16.mxu0 0
    %812 = vmatpush1.bf16.msra.mxu0 %v292
    %813 = vmatprep.subr.bf16.mxu0 0
    %814 = vmatpush2.bf16.msra.mxu0 0
    %815 = vmatprep.subr.bf16.mxu0 0
    %816 = vmatpush2.bf16.msra.mxu0 0
    %817 = vmatprep.subr.bf16.mxu0 0
    %818 = vmatpush2.bf16.msra.mxu0 0
    %819 = vmatprep.subr.bf16.mxu0 0
    %820 = vmatpush2.bf16.msra.mxu0 0
    %821 = vmatprep.subr.bf16.mxu0 0
    %822 = vmatpush2.bf16.msra.mxu0 0
    %823 = vmatprep.subr.bf16.mxu0 0
    %824 = vmatpush2.bf16.msra.mxu0 0
    %825 = vmatprep.subr.bf16.mxu0 0
    %826 = vmatpush2.bf16.msra.mxu0 0
    %827 = vmatprep.subr.bf16.mxu0 0
    %828 = vmatpush2.bf16.msra.mxu0 0
    %829 = vmatprep.mubr.bf16.mxu0 0
    %830 = vmatmul.mubr.bf16.gmra.mxu0 %v795
    %v831 = vpop.f32.mrf.mxu0
    %v832 = vadd.f32 %v790, %v831
    %v833 = vpop.f32.mrf.mxu0
    %v834 = vpop.f32.mrf.mxu0
    %v835 = vpop.f32.mrf.mxu0
    %836 = vdwg.mxu0
    %v837 = vpack.c.bf16 %v785, %v785
    %s838 = scalar_lea.vmem [#allocation2], 32
    %v839 = vld [vmem:[%s838 + $0x4] sm:$0xf]
    %v840 = vunpack.c.l.bf16 %v839
    %842 = vrot.lane.b32.xlu0 %v837, 64
    %v843 = vpop.permute.xlu0 %842
    %v845 = vsel %vm296, %v843, 0
    %847 = vmatprep.subr.bf16.mxu0 0
    %848 = vmatpush1.bf16.msra.mxu0 0
    %849 = vmatprep.subr.bf16.mxu0 0
    %850 = vmatpush1.bf16.msra.mxu0 0
    %851 = vmatprep.subr.bf16.mxu0 0
    %852 = vmatpush1.bf16.msra.mxu0 0
    %853 = vmatprep.subr.bf16.mxu0 0
    %854 = vmatpush1.bf16.msra.mxu0 0
    %855 = vmatprep.subr.bf16.mxu0 0
    %856 = vmatpush1.bf16.msra.mxu0 0
    %857 = vmatprep.subr.bf16.mxu0 0
    %858 = vmatpush1.bf16.msra.mxu0 0
    %859 = vmatprep.subr.bf16.mxu0 0
    %860 = vmatpush1.bf16.msra.mxu0 %v352
    %861 = vmatprep.subr.bf16.mxu0 0
    %862 = vmatpush1.bf16.msra.mxu0 %v351
    %863 = vmatprep.subr.bf16.mxu0 0
    %864 = vmatpush2.bf16.msra.mxu0 0
    %865 = vmatprep.subr.bf16.mxu0 0
    %866 = vmatpush2.bf16.msra.mxu0 0
    %867 = vmatprep.subr.bf16.mxu0 0
    %868 = vmatpush2.bf16.msra.mxu0 0
    %869 = vmatprep.subr.bf16.mxu0 0
    %870 = vmatpush2.bf16.msra.mxu0 0
    %871 = vmatprep.subr.bf16.mxu0 0
    %872 = vmatpush2.bf16.msra.mxu0 0
    %873 = vmatprep.subr.bf16.mxu0 0
    %874 = vmatpush2.bf16.msra.mxu0 0
    %875 = vmatprep.subr.bf16.mxu0 0
    %876 = vmatpush2.bf16.msra.mxu0 0
    %877 = vmatprep.subr.bf16.mxu0 0
    %878 = vmatpush2.bf16.msra.mxu0 0
    %879 = vmatprep.mubr.bf16.mxu0 0
    %880 = vmatmul.mubr.bf16.gmra.mxu0 %v845
    %v881 = vpop.f32.mrf.mxu0
    %v882 = vadd.f32 %v840, %v881
    %v883 = vpop.f32.mrf.mxu0
    %v884 = vpop.f32.mrf.mxu0
    %v885 = vpop.f32.mrf.mxu0
    %886 = vdwg.mxu0
    %vm887 = vcmp.gt.s32.totalorder %v273, 3
    %v888 = vxor.u32 %v832, 2147483648
    %v889 = vmul.f32 %v888, 1.442695
    %v890 = vpow.pop %v889
    %v891 = vadd.f32 %v890, 1.0
    %v892 = vrcp.pop %v891
    %v893 = vmul.f32 1.0, %v892
    %v894 = vtanh.pop %v832
    %v895 = vmul.f32 %v893, %v754
    %897 = vrot.lane.b32.xlu0 %v894, 32
    %v898 = vpop.permute.xlu0 %897
    %v900 = vmul.f32 %v893, %v898
    %902 = vrot.lane.b32.xlu0 %v900, 32
    %v903 = vpop.permute.xlu0 %902
    %v905 = vadd.f32 %v895, %v903
    %v906 = vtanh.pop %v905
    %908 = vrot.lane.b32.xlu0 %v906, 32
    %v909 = vpop.permute.xlu0 %908
    %v911 = vmul.f32 %v893, %v909
    %v912 = vsel %vm887, 1, 0
    %913 = vset.pattern.permute.xlu0 0
    %914 = vperm.xlu0 %913, %v912
    %v915 = vpop.permute.xlu0 %914
    %vm916 = vcmp.eq.s32.totalorder %v915, 1
    %v917 = vsel %vm916, %v911, %v753
    %v918 = vsel %vm916, %v905, %v754
    %vm919 = vcmp.gt.s32.totalorder %v273, 4
    %v920 = vxor.u32 %v882, 2147483648
    %v921 = vmul.f32 %v920, 1.442695
    %v922 = vpow.pop %v921
    %v923 = vadd.f32 %v922, 1.0
    %v924 = vrcp.pop %v923
    %v925 = vmul.f32 1.0, %v924
    %v926 = vtanh.pop %v882
    %v927 = vmul.f32 %v925, %v786
    %929 = vrot.lane.b32.xlu0 %v926, 32
    %v930 = vpop.permute.xlu0 %929
    %v932 = vmul.f32 %v925, %v930
    %934 = vrot.lane.b32.xlu0 %v932, 32
    %v935 = vpop.permute.xlu0 %934
    %v937 = vadd.f32 %v927, %v935
    %v938 = vtanh.pop %v937
    %940 = vrot.lane.b32.xlu0 %v938, 32
    %v941 = vpop.permute.xlu0 %940
    %v943 = vmul.f32 %v925, %v941
    %v944 = vsel %vm919, 1, 0
    %945 = vset.pattern.permute.xlu0 0
    %946 = vperm.xlu0 %945, %v944
    %v947 = vpop.permute.xlu0 %946
    %vm948 = vcmp.eq.s32.totalorder %v947, 1
    %v949 = vsel %vm948, %v943, %v785
    %v950 = vsel %vm948, %v937, %v786
    %v951 = vpack.c.bf16 %v917, %v917
    %v952 = vld [vmem:[%s838] sm:$0xf]
    %v953 = vunpack.c.l.bf16 %v952
    %955 = vrot.lane.b32.xlu0 %v951, 64
    %v956 = vpop.permute.xlu0 %955
    %v958 = vsel %vm296, %v956, 0
    %960 = vmatprep.subr.bf16.mxu0 0
    %961 = vmatpush1.bf16.msra.mxu0 0
    %962 = vmatprep.subr.bf16.mxu0 0
    %963 = vmatpush1.bf16.msra.mxu0 0
    %964 = vmatprep.subr.bf16.mxu0 0
    %965 = vmatpush1.bf16.msra.mxu0 0
    %966 = vmatprep.subr.bf16.mxu0 0
    %967 = vmatpush1.bf16.msra.mxu0 0
    %968 = vmatprep.subr.bf16.mxu0 0
    %969 = vmatpush1.bf16.msra.mxu0 0
    %970 = vmatprep.subr.bf16.mxu0 0
    %971 = vmatpush1.bf16.msra.mxu0 0
    %972 = vmatprep.subr.bf16.mxu0 0
    %973 = vmatpush1.bf16.msra.mxu0 %v293
    %974 = vmatprep.subr.bf16.mxu0 0
    %975 = vmatpush1.bf16.msra.mxu0 %v292
    %976 = vmatprep.subr.bf16.mxu0 0
    %977 = vmatpush2.bf16.msra.mxu0 0
    %978 = vmatprep.subr.bf16.mxu0 0
    %979 = vmatpush2.bf16.msra.mxu0 0
    %980 = vmatprep.subr.bf16.mxu0 0
    %981 = vmatpush2.bf16.msra.mxu0 0
    %982 = vmatprep.subr.bf16.mxu0 0
    %983 = vmatpush2.bf16.msra.mxu0 0
    %984 = vmatprep.subr.bf16.mxu0 0
    %985 = vmatpush2.bf16.msra.mxu0 0
    %986 = vmatprep.subr.bf16.mxu0 0
    %987 = vmatpush2.bf16.msra.mxu0 0
    %988 = vmatprep.subr.bf16.mxu0 0
    %989 = vmatpush2.bf16.msra.mxu0 0
    %990 = vmatprep.subr.bf16.mxu0 0
    %991 = vmatpush2.bf16.msra.mxu0 0
    %992 = vmatprep.mubr.bf16.mxu0 0
    %993 = vmatmul.mubr.bf16.gmra.mxu0 %v958
    %v994 = vpop.f32.mrf.mxu0
    %v995 = vadd.f32 %v953, %v994
    %v996 = vpop.f32.mrf.mxu0
    %v997 = vpop.f32.mrf.mxu0
    %v998 = vpop.f32.mrf.mxu0
    %999 = vdwg.mxu0
    %v1000 = vpack.c.bf16 %v949, %v949
    %v1001 = vld [vmem:[%s788 + $0x4] sm:$0xf]
    %v1002 = vunpack.c.l.bf16 %v1001
    %1004 = vrot.lane.b32.xlu0 %v1000, 64
    %v1005 = vpop.permute.xlu0 %1004
    %v1007 = vsel %vm296, %v1005, 0
    %1009 = vmatprep.subr.bf16.mxu0 0
    %1010 = vmatpush1.bf16.msra.mxu0 0
    %1011 = vmatprep.subr.bf16.mxu0 0
    %1012 = vmatpush1.bf16.msra.mxu0 0
    %1013 = vmatprep.subr.bf16.mxu0 0
    %1014 = vmatpush1.bf16.msra.mxu0 0
    %1015 = vmatprep.subr.bf16.mxu0 0
    %1016 = vmatpush1.bf16.msra.mxu0 0
    %1017 = vmatprep.subr.bf16.mxu0 0
    %1018 = vmatpush1.bf16.msra.mxu0 0
    %1019 = vmatprep.subr.bf16.mxu0 0
    %1020 = vmatpush1.bf16.msra.mxu0 0
    %1021 = vmatprep.subr.bf16.mxu0 0
    %1022 = vmatpush1.bf16.msra.mxu0 %v352
    %1023 = vmatprep.subr.bf16.mxu0 0
    %1024 = vmatpush1.bf16.msra.mxu0 %v351
    %1025 = vmatprep.subr.bf16.mxu0 0
    %1026 = vmatpush2.bf16.msra.mxu0 0
    %1027 = vmatprep.subr.bf16.mxu0 0
    %1028 = vmatpush2.bf16.msra.mxu0 0
    %1029 = vmatprep.subr.bf16.mxu0 0
    %1030 = vmatpush2.bf16.msra.mxu0 0
    %1031 = vmatprep.subr.bf16.mxu0 0
    %1032 = vmatpush2.bf16.msra.mxu0 0
    %1033 = vmatprep.subr.bf16.mxu0 0
    %1034 = vmatpush2.bf16.msra.mxu0 0
    %1035 = vmatprep.subr.bf16.mxu0 0
    %1036 = vmatpush2.bf16.msra.mxu0 0
    %1037 = vmatprep.subr.bf16.mxu0 0
    %1038 = vmatpush2.bf16.msra.mxu0 0
    %1039 = vmatprep.subr.bf16.mxu0 0
    %1040 = vmatpush2.bf16.msra.mxu0 0
    %1041 = vmatprep.mubr.bf16.mxu0 0
    %1042 = vmatmul.mubr.bf16.gmra.mxu0 %v1007
    %v1043 = vpop.f32.mrf.mxu0
    %v1044 = vadd.f32 %v1002, %v1043
    %v1045 = vpop.f32.mrf.mxu0
    %v1046 = vpop.f32.mrf.mxu0
    %v1047 = vpop.f32.mrf.mxu0
    %1048 = vdwg.mxu0
    %v1049 = vxor.u32 %v995, 2147483648
    %v1050 = vmul.f32 %v1049, 1.442695
    %v1051 = vpow.pop %v1050
    %v1052 = vadd.f32 %v1051, 1.0
    %v1053 = vrcp.pop %v1052
    %v1054 = vmul.f32 1.0, %v1053
    %v1055 = vtanh.pop %v995
    %v1056 = vmul.f32 %v1054, %v918
    %1058 = vrot.lane.b32.xlu0 %v1055, 32
    %v1059 = vpop.permute.xlu0 %1058
    %v1061 = vmul.f32 %v1054, %v1059
    %1063 = vrot.lane.b32.xlu0 %v1061, 32
    %v1064 = vpop.permute.xlu0 %1063
    %v1066 = vadd.f32 %v1056, %v1064
    %v1067 = vtanh.pop %v1066
    %1069 = vrot.lane.b32.xlu0 %v1067, 32
    %v1070 = vpop.permute.xlu0 %1069
    %v1072 = vmul.f32 %v1054, %v1070
    %v1073 = vsel %vm948, %v1072, %v917
    %v1074 = vsel %vm948, %v1066, %v918
    %v1075 = vxor.u32 %v1044, 2147483648
    %v1076 = vmul.f32 %v1075, 1.442695
    %v1077 = vpow.pop %v1076
    %v1078 = vadd.f32 %v1077, 1.0
    %v1079 = vrcp.pop %v1078
    %v1080 = vmul.f32 1.0, %v1079
    %v1081 = vtanh.pop %v1044
    %v1082 = vmul.f32 %v1080, %v950
    %1084 = vrot.lane.b32.xlu0 %v1081, 32
    %v1085 = vpop.permute.xlu0 %1084
    %v1087 = vmul.f32 %v1080, %v1085
    %1089 = vrot.lane.b32.xlu0 %v1087, 32
    %v1090 = vpop.permute.xlu0 %1089
    %v1092 = vadd.f32 %v1082, %v1090
    %v1093 = vtanh.pop %v1092
    %1095 = vrot.lane.b32.xlu0 %v1093, 32
    %v1096 = vpop.permute.xlu0 %1095
    %v1098 = vmul.f32 %v1080, %v1096
    %v1099 = vsel %vm916, %v1098, %v949
    %v1100 = vsel %vm916, %v1092, %v950
    %v1101 = vpack.c.bf16 %v1073, %v1073
    %v1102 = vld [vmem:[%s674] sm:$0xf]
    %v1103 = vunpack.c.l.bf16 %v1102
    %1105 = vrot.lane.b32.xlu0 %v1101, 64
    %v1106 = vpop.permute.xlu0 %1105
    %v1108 = vsel %vm296, %v1106, 0
    %1110 = vmatprep.subr.bf16.mxu0 0
    %1111 = vmatpush1.bf16.msra.mxu0 0
    %1112 = vmatprep.subr.bf16.mxu0 0
    %1113 = vmatpush1.bf16.msra.mxu0 0
    %1114 = vmatprep.subr.bf16.mxu0 0
    %1115 = vmatpush1.bf16.msra.mxu0 0
    %1116 = vmatprep.subr.bf16.mxu0 0
    %1117 = vmatpush1.bf16.msra.mxu0 0
    %1118 = vmatprep.subr.bf16.mxu0 0
    %1119 = vmatpush1.bf16.msra.mxu0 0
    %1120 = vmatprep.subr.bf16.mxu0 0
    %1121 = vmatpush1.bf16.msra.mxu0 0
    %1122 = vmatprep.subr.bf16.mxu0 0
    %1123 = vmatpush1.bf16.msra.mxu0 %v293
    %1124 = vmatprep.subr.bf16.mxu0 0
    %1125 = vmatpush1.bf16.msra.mxu0 %v292
    %1126 = vmatprep.subr.bf16.mxu0 0
    %1127 = vmatpush2.bf16.msra.mxu0 0
    %1128 = vmatprep.subr.bf16.mxu0 0
    %1129 = vmatpush2.bf16.msra.mxu0 0
    %1130 = vmatprep.subr.bf16.mxu0 0
    %1131 = vmatpush2.bf16.msra.mxu0 0
    %1132 = vmatprep.subr.bf16.mxu0 0
    %1133 = vmatpush2.bf16.msra.mxu0 0
    %1134 = vmatprep.subr.bf16.mxu0 0
    %1135 = vmatpush2.bf16.msra.mxu0 0
    %1136 = vmatprep.subr.bf16.mxu0 0
    %1137 = vmatpush2.bf16.msra.mxu0 0
    %1138 = vmatprep.subr.bf16.mxu0 0
    %1139 = vmatpush2.bf16.msra.mxu0 0
    %1140 = vmatprep.subr.bf16.mxu0 0
    %1141 = vmatpush2.bf16.msra.mxu0 0
    %1142 = vmatprep.mubr.bf16.mxu0 0
    %1143 = vmatmul.mubr.bf16.gmra.mxu0 %v1108
    %v1144 = vpop.f32.mrf.mxu0
    %v1145 = vadd.f32 %v1103, %v1144
    %v1146 = vpop.f32.mrf.mxu0
    %v1147 = vpop.f32.mrf.mxu0
    %v1148 = vpop.f32.mrf.mxu0
    %1149 = vdwg.mxu0
    %v1150 = vpack.c.bf16 %v1099, %v1099
    %v1151 = vld [vmem:[%s624 + $0x4] sm:$0xf]
    %v1152 = vunpack.c.l.bf16 %v1151
    %1154 = vrot.lane.b32.xlu0 %v1150, 64
    %v1155 = vpop.permute.xlu0 %1154
    %v1157 = vsel %vm296, %v1155, 0
    %1159 = vmatprep.subr.bf16.mxu0 0
    %1160 = vmatpush1.bf16.msra.mxu0 0
    %1161 = vmatprep.subr.bf16.mxu0 0
    %1162 = vmatpush1.bf16.msra.mxu0 0
    %1163 = vmatprep.subr.bf16.mxu0 0
    %1164 = vmatpush1.bf16.msra.mxu0 0
    %1165 = vmatprep.subr.bf16.mxu0 0
    %1166 = vmatpush1.bf16.msra.mxu0 0
    %1167 = vmatprep.subr.bf16.mxu0 0
    %1168 = vmatpush1.bf16.msra.mxu0 0
    %1169 = vmatprep.subr.bf16.mxu0 0
    %1170 = vmatpush1.bf16.msra.mxu0 0
    %1171 = vmatprep.subr.bf16.mxu0 0
    %1172 = vmatpush1.bf16.msra.mxu0 %v352
    %1173 = vmatprep.subr.bf16.mxu0 0
    %1174 = vmatpush1.bf16.msra.mxu0 %v351
    %1175 = vmatprep.subr.bf16.mxu0 0
    %1176 = vmatpush2.bf16.msra.mxu0 0
    %1177 = vmatprep.subr.bf16.mxu0 0
    %1178 = vmatpush2.bf16.msra.mxu0 0
    %1179 = vmatprep.subr.bf16.mxu0 0
    %1180 = vmatpush2.bf16.msra.mxu0 0
    %1181 = vmatprep.subr.bf16.mxu0 0
    %1182 = vmatpush2.bf16.msra.mxu0 0
    %1183 = vmatprep.subr.bf16.mxu0 0
    %1184 = vmatpush2.bf16.msra.mxu0 0
    %1185 = vmatprep.subr.bf16.mxu0 0
    %1186 = vmatpush2.bf16.msra.mxu0 0
    %1187 = vmatprep.subr.bf16.mxu0 0
    %1188 = vmatpush2.bf16.msra.mxu0 0
    %1189 = vmatprep.subr.bf16.mxu0 0
    %1190 = vmatpush2.bf16.msra.mxu0 0
    %1191 = vmatprep.mubr.bf16.mxu0 0
    %1192 = vmatmul.mubr.bf16.gmra.mxu0 %v1157
    %v1193 = vpop.f32.mrf.mxu0
    %v1194 = vadd.f32 %v1152, %v1193
    %v1195 = vpop.f32.mrf.mxu0
    %v1196 = vpop.f32.mrf.mxu0
    %v1197 = vpop.f32.mrf.mxu0
    %1198 = vdwg.mxu0
    %v1199 = vxor.u32 %v1145, 2147483648
    %v1200 = vmul.f32 %v1199, 1.442695
    %v1201 = vpow.pop %v1200
    %v1202 = vadd.f32 %v1201, 1.0
    %v1203 = vrcp.pop %v1202
    %v1204 = vmul.f32 1.0, %v1203
    %v1205 = vtanh.pop %v1145
    %v1206 = vmul.f32 %v1204, %v1074
    %1208 = vrot.lane.b32.xlu0 %v1205, 32
    %v1209 = vpop.permute.xlu0 %1208
    %v1211 = vmul.f32 %v1204, %v1209
    %1213 = vrot.lane.b32.xlu0 %v1211, 32
    %v1214 = vpop.permute.xlu0 %1213
    %v1216 = vadd.f32 %v1206, %v1214
    %v1217 = vtanh.pop %v1216
    %1219 = vrot.lane.b32.xlu0 %v1217, 32
    %v1220 = vpop.permute.xlu0 %1219
    %v1222 = vmul.f32 %v1204, %v1220
    %v1223 = vsel %vm784, %v1222, %v1073
    %v1224 = vsel %vm784, %v1216, %v1074
    %v1225 = vxor.u32 %v1194, 2147483648
    %v1226 = vmul.f32 %v1225, 1.442695
    %v1227 = vpow.pop %v1226
    %v1228 = vadd.f32 %v1227, 1.0
    %v1229 = vrcp.pop %v1228
    %v1230 = vmul.f32 1.0, %v1229
    %v1231 = vtanh.pop %v1194
    %v1232 = vmul.f32 %v1230, %v1100
    %1234 = vrot.lane.b32.xlu0 %v1231, 32
    %v1235 = vpop.permute.xlu0 %1234
    %v1237 = vmul.f32 %v1230, %v1235
    %1239 = vrot.lane.b32.xlu0 %v1237, 32
    %v1240 = vpop.permute.xlu0 %1239
    %v1242 = vadd.f32 %v1232, %v1240
    %v1243 = vtanh.pop %v1242
    %1245 = vrot.lane.b32.xlu0 %v1243, 32
    %v1246 = vpop.permute.xlu0 %1245
    %v1248 = vmul.f32 %v1230, %v1246
    %v1249 = vsel %vm752, %v1248, %v1099
    %v1250 = vsel %vm752, %v1242, %v1100
    %v1251 = vpack.c.bf16 %v1223, %v1223
    %v1252 = vld [vmem:[%s510] sm:$0xf]
    %v1253 = vunpack.c.l.bf16 %v1252
    %1255 = vrot.lane.b32.xlu0 %v1251, 64
    %v1256 = vpop.permute.xlu0 %1255
    %v1258 = vsel %vm296, %v1256, 0
    %1260 = vmatprep.subr.bf16.mxu0 0
    %1261 = vmatpush1.bf16.msra.mxu0 0
    %1262 = vmatprep.subr.bf16.mxu0 0
    %1263 = vmatpush1.bf16.msra.mxu0 0
    %1264 = vmatprep.subr.bf16.mxu0 0
    %1265 = vmatpush1.bf16.msra.mxu0 0
    %1266 = vmatprep.subr.bf16.mxu0 0
    %1267 = vmatpush1.bf16.msra.mxu0 0
    %1268 = vmatprep.subr.bf16.mxu0 0
    %1269 = vmatpush1.bf16.msra.mxu0 0
    %1270 = vmatprep.subr.bf16.mxu0 0
    %1271 = vmatpush1.bf16.msra.mxu0 0
    %1272 = vmatprep.subr.bf16.mxu0 0
    %1273 = vmatpush1.bf16.msra.mxu0 %v293
    %1274 = vmatprep.subr.bf16.mxu0 0
    %1275 = vmatpush1.bf16.msra.mxu0 %v292
    %1276 = vmatprep.subr.bf16.mxu0 0
    %1277 = vmatpush2.bf16.msra.mxu0 0
    %1278 = vmatprep.subr.bf16.mxu0 0
    %1279 = vmatpush2.bf16.msra.mxu0 0
    %1280 = vmatprep.subr.bf16.mxu0 0
    %1281 = vmatpush2.bf16.msra.mxu0 0
    %1282 = vmatprep.subr.bf16.mxu0 0
    %1283 = vmatpush2.bf16.msra.mxu0 0
    %1284 = vmatprep.subr.bf16.mxu0 0
    %1285 = vmatpush2.bf16.msra.mxu0 0
    %1286 = vmatprep.subr.bf16.mxu0 0
    %1287 = vmatpush2.bf16.msra.mxu0 0
    %1288 = vmatprep.subr.bf16.mxu0 0
    %1289 = vmatpush2.bf16.msra.mxu0 0
    %1290 = vmatprep.subr.bf16.mxu0 0
    %1291 = vmatpush2.bf16.msra.mxu0 0
    %1292 = vmatprep.mubr.bf16.mxu0 0
    %1293 = vmatmul.mubr.bf16.gmra.mxu0 %v1258
    %v1294 = vpop.f32.mrf.mxu0
    %v1295 = vadd.f32 %v1253, %v1294
    %v1296 = vpop.f32.mrf.mxu0
    %v1297 = vpop.f32.mrf.mxu0
    %v1298 = vpop.f32.mrf.mxu0
    %1299 = vdwg.mxu0
    %v1300 = vpack.c.bf16 %v1249, %v1249
    %v1301 = vld [vmem:[%s460 + $0x4] sm:$0xf]
    %v1302 = vunpack.c.l.bf16 %v1301
    %1304 = vrot.lane.b32.xlu0 %v1300, 64
    %v1305 = vpop.permute.xlu0 %1304
    %v1307 = vsel %vm296, %v1305, 0
    %1309 = vmatprep.subr.bf16.mxu0 0
    %1310 = vmatpush1.bf16.msra.mxu0 0
    %1311 = vmatprep.subr.bf16.mxu0 0
    %1312 = vmatpush1.bf16.msra.mxu0 0
    %1313 = vmatprep.subr.bf16.mxu0 0
    %1314 = vmatpush1.bf16.msra.mxu0 0
    %1315 = vmatprep.subr.bf16.mxu0 0
    %1316 = vmatpush1.bf16.msra.mxu0 0
    %1317 = vmatprep.subr.bf16.mxu0 0
    %1318 = vmatpush1.bf16.msra.mxu0 0
    %1319 = vmatprep.subr.bf16.mxu0 0
    %1320 = vmatpush1.bf16.msra.mxu0 0
    %1321 = vmatprep.subr.bf16.mxu0 0
    %1322 = vmatpush1.bf16.msra.mxu0 %v352
    %1323 = vmatprep.subr.bf16.mxu0 0
    %1324 = vmatpush1.bf16.msra.mxu0 %v351
    %1325 = vmatprep.subr.bf16.mxu0 0
    %1326 = vmatpush2.bf16.msra.mxu0 0
    %1327 = vmatprep.subr.bf16.mxu0 0
    %1328 = vmatpush2.bf16.msra.mxu0 0
    %1329 = vmatprep.subr.bf16.mxu0 0
    %1330 = vmatpush2.bf16.msra.mxu0 0
    %1331 = vmatprep.subr.bf16.mxu0 0
    %1332 = vmatpush2.bf16.msra.mxu0 0
    %1333 = vmatprep.subr.bf16.mxu0 0
    %1334 = vmatpush2.bf16.msra.mxu0 0
    %1335 = vmatprep.subr.bf16.mxu0 0
    %1336 = vmatpush2.bf16.msra.mxu0 0
    %1337 = vmatprep.subr.bf16.mxu0 0
    %1338 = vmatpush2.bf16.msra.mxu0 0
    %1339 = vmatprep.subr.bf16.mxu0 0
    %1340 = vmatpush2.bf16.msra.mxu0 0
    %1341 = vmatprep.mubr.bf16.mxu0 0
    %1342 = vmatmul.mubr.bf16.gmra.mxu0 %v1307
    %v1343 = vpop.f32.mrf.mxu0
    %v1344 = vadd.f32 %v1302, %v1343
    %v1345 = vpop.f32.mrf.mxu0
    %v1346 = vpop.f32.mrf.mxu0
    %v1347 = vpop.f32.mrf.mxu0
    %1348 = vdwg.mxu0
    %v1349 = vxor.u32 %v1295, 2147483648
    %v1350 = vmul.f32 %v1349, 1.442695
    %v1351 = vpow.pop %v1350
    %v1352 = vadd.f32 %v1351, 1.0
    %v1353 = vrcp.pop %v1352
    %v1354 = vmul.f32 1.0, %v1353
    %v1355 = vtanh.pop %v1295
    %v1356 = vmul.f32 %v1354, %v1224
    %1358 = vrot.lane.b32.xlu0 %v1355, 32
    %v1359 = vpop.permute.xlu0 %1358
    %v1361 = vmul.f32 %v1354, %v1359
    %1363 = vrot.lane.b32.xlu0 %v1361, 32
    %v1364 = vpop.permute.xlu0 %1363
    %v1366 = vadd.f32 %v1356, %v1364
    %v1367 = vtanh.pop %v1366
    %1369 = vrot.lane.b32.xlu0 %v1367, 32
    %v1370 = vpop.permute.xlu0 %1369
    %v1372 = vmul.f32 %v1354, %v1370
    %v1373 = vsel %vm620, %v1372, %v1223
    %v1374 = vsel %vm620, %v1366, %v1224
    %v1375 = vxor.u32 %v1344, 2147483648
    %v1376 = vmul.f32 %v1375, 1.442695
    %v1377 = vpow.pop %v1376
    %v1378 = vadd.f32 %v1377, 1.0
    %v1379 = vrcp.pop %v1378
    %v1380 = vmul.f32 1.0, %v1379
    %v1381 = vtanh.pop %v1344
    %v1382 = vmul.f32 %v1380, %v1250
    %1384 = vrot.lane.b32.xlu0 %v1381, 32
    %v1385 = vpop.permute.xlu0 %1384
    %v1387 = vmul.f32 %v1380, %v1385
    %1389 = vrot.lane.b32.xlu0 %v1387, 32
    %v1390 = vpop.permute.xlu0 %1389
    %v1392 = vadd.f32 %v1382, %v1390
    %v1393 = vtanh.pop %v1392
    %1395 = vrot.lane.b32.xlu0 %v1393, 32
    %v1396 = vpop.permute.xlu0 %1395
    %v1398 = vmul.f32 %v1380, %v1396
    %v1399 = vsel %vm588, %v1398, %v1249
    %v1400 = vsel %vm588, %v1392, %v1250
    %v1401 = vpack.c.bf16 %v1373, %v1373
    %v1402 = vld [vmem:[%s340] sm:$0xf]
    %v1403 = vunpack.c.l.bf16 %v1402
    %1405 = vrot.lane.b32.xlu0 %v1401, 64
    %v1406 = vpop.permute.xlu0 %1405
    %v1408 = vsel %vm296, %v1406, 0
    %1410 = vmatprep.subr.bf16.mxu0 0
    %1411 = vmatpush1.bf16.msra.mxu0 0
    %1412 = vmatprep.subr.bf16.mxu0 0
    %1413 = vmatpush1.bf16.msra.mxu0 0
    %1414 = vmatprep.subr.bf16.mxu0 0
    %1415 = vmatpush1.bf16.msra.mxu0 0
    %1416 = vmatprep.subr.bf16.mxu0 0
    %1417 = vmatpush1.bf16.msra.mxu0 0
    %1418 = vmatprep.subr.bf16.mxu0 0
    %1419 = vmatpush1.bf16.msra.mxu0 0
    %1420 = vmatprep.subr.bf16.mxu0 0
    %1421 = vmatpush1.bf16.msra.mxu0 0
    %1422 = vmatprep.subr.bf16.mxu0 0
    %1423 = vmatpush1.bf16.msra.mxu0 %v293
    %1424 = vmatprep.subr.bf16.mxu0 0
    %1425 = vmatpush1.bf16.msra.mxu0 %v292
    %1426 = vmatprep.subr.bf16.mxu0 0
    %1427 = vmatpush2.bf16.msra.mxu0 0
    %1428 = vmatprep.subr.bf16.mxu0 0
    %1429 = vmatpush2.bf16.msra.mxu0 0
    %1430 = vmatprep.subr.bf16.mxu0 0
    %1431 = vmatpush2.bf16.msra.mxu0 0
    %1432 = vmatprep.subr.bf16.mxu0 0
    %1433 = vmatpush2.bf16.msra.mxu0 0
    %1434 = vmatprep.subr.bf16.mxu0 0
    %1435 = vmatpush2.bf16.msra.mxu0 0
    %1436 = vmatprep.subr.bf16.mxu0 0
    %1437 = vmatpush2.bf16.msra.mxu0 0
    %1438 = vmatprep.subr.bf16.mxu0 0
    %1439 = vmatpush2.bf16.msra.mxu0 0
    %1440 = vmatprep.subr.bf16.mxu0 0
    %1441 = vmatpush2.bf16.msra.mxu0 0
    %1442 = vmatprep.mubr.bf16.mxu0 0
    %1443 = vmatmul.mubr.bf16.gmra.mxu0 %v1408
    %v1444 = vpop.f32.mrf.mxu0
    %v1445 = vadd.f32 %v1403, %v1444
    %v1446 = vpop.f32.mrf.mxu0
    %v1447 = vpop.f32.mrf.mxu0
    %v1448 = vpop.f32.mrf.mxu0
    %1449 = vdwg.mxu0
    %v1450 = vpack.c.bf16 %v1399, %v1399
    %v1451 = vld [vmem:[#allocation2 + $0x4] sm:$0xf]
    %v1452 = vunpack.c.l.bf16 %v1451
    %1454 = vrot.lane.b32.xlu0 %v1450, 64
    %v1455 = vpop.permute.xlu0 %1454
    %v1457 = vsel %vm296, %v1455, 0
    %1459 = vmatprep.subr.bf16.mxu0 0
    %1460 = vmatpush1.bf16.msra.mxu0 0
    %1461 = vmatprep.subr.bf16.mxu0 0
    %1462 = vmatpush1.bf16.msra.mxu0 0
    %1463 = vmatprep.subr.bf16.mxu0 0
    %1464 = vmatpush1.bf16.msra.mxu0 0
    %1465 = vmatprep.subr.bf16.mxu0 0
    %1466 = vmatpush1.bf16.msra.mxu0 0
    %1467 = vmatprep.subr.bf16.mxu0 0
    %1468 = vmatpush1.bf16.msra.mxu0 0
    %1469 = vmatprep.subr.bf16.mxu0 0
    %1470 = vmatpush1.bf16.msra.mxu0 0
    %1471 = vmatprep.subr.bf16.mxu0 0
    %1472 = vmatpush1.bf16.msra.mxu0 %v352
    %1473 = vmatprep.subr.bf16.mxu0 0
    %1474 = vmatpush1.bf16.msra.mxu0 %v351
    %1475 = vmatprep.subr.bf16.mxu0 0
    %1476 = vmatpush2.bf16.msra.mxu0 0
    %1477 = vmatprep.subr.bf16.mxu0 0
    %1478 = vmatpush2.bf16.msra.mxu0 0
    %1479 = vmatprep.subr.bf16.mxu0 0
    %1480 = vmatpush2.bf16.msra.mxu0 0
    %1481 = vmatprep.subr.bf16.mxu0 0
    %1482 = vmatpush2.bf16.msra.mxu0 0
    %1483 = vmatprep.subr.bf16.mxu0 0
    %1484 = vmatpush2.bf16.msra.mxu0 0
    %1485 = vmatprep.subr.bf16.mxu0 0
    %1486 = vmatpush2.bf16.msra.mxu0 0
    %1487 = vmatprep.subr.bf16.mxu0 0
    %1488 = vmatpush2.bf16.msra.mxu0 0
    %1489 = vmatprep.subr.bf16.mxu0 0
    %1490 = vmatpush2.bf16.msra.mxu0 0
    %1491 = vmatprep.mubr.bf16.mxu0 0
    %1492 = vmatmul.mubr.bf16.gmra.mxu0 %v1457
    %v1493 = vpop.f32.mrf.mxu0
    %v1494 = vadd.f32 %v1452, %v1493
    %v1495 = vpop.f32.mrf.mxu0
    %v1496 = vpop.f32.mrf.mxu0
    %v1497 = vpop.f32.mrf.mxu0
    %1498 = vdwg.mxu0
    %v1499 = vxor.u32 %v1445, 2147483648
    %v1500 = vmul.f32 %v1499, 1.442695
    %v1501 = vpow.pop %v1500
    %v1502 = vadd.f32 %v1501, 1.0
    %v1503 = vrcp.pop %v1502
    %v1504 = vmul.f32 1.0, %v1503
    %v1505 = vtanh.pop %v1445
    %v1506 = vmul.f32 %v1504, %v1374
    %1508 = vrot.lane.b32.xlu0 %v1505, 32
    %v1509 = vpop.permute.xlu0 %1508
    %v1511 = vmul.f32 %v1504, %v1509
    %1513 = vrot.lane.b32.xlu0 %v1511, 32
    %v1514 = vpop.permute.xlu0 %1513
    %v1516 = vadd.f32 %v1506, %v1514
    %v1517 = vtanh.pop %v1516
    %1519 = vrot.lane.b32.xlu0 %v1517, 32
    %v1520 = vpop.permute.xlu0 %1519
    %v1522 = vmul.f32 %v1504, %v1520
    %v1523 = vsel %vm456, %v1522, %v1373
    %v1524 = vxor.u32 %v1494, 2147483648
    %v1525 = vmul.f32 %v1524, 1.442695
    %v1526 = vpow.pop %v1525
    %v1527 = vadd.f32 %v1526, 1.0
    %v1528 = vrcp.pop %v1527
    %v1529 = vmul.f32 1.0, %v1528
    %v1530 = vtanh.pop %v1494
    %v1531 = vmul.f32 %v1529, %v1400
    %1533 = vrot.lane.b32.xlu0 %v1530, 32
    %v1534 = vpop.permute.xlu0 %1533
    %v1536 = vmul.f32 %v1529, %v1534
    %1538 = vrot.lane.b32.xlu0 %v1536, 32
    %v1539 = vpop.permute.xlu0 %1538
    %v1541 = vadd.f32 %v1531, %v1539
    %v1542 = vtanh.pop %v1541
    %1544 = vrot.lane.b32.xlu0 %v1542, 32
    %v1545 = vpop.permute.xlu0 %1544
    %v1547 = vmul.f32 %v1529, %v1545
    %v1548 = vsel %vm424, %v1547, %v1399
    %1550 = vrot.lane.b32.xlu0 %v1523, 64
    %v1551 = vpop.permute.xlu0 %1550
    %1554 = vrot.lane.b32.xlu0 %v1548, 96
    %v1555 = vpop.permute.xlu0 %1554
    %v1557 = vsel %vm296, %v1551, %v1555
    %vm1558 = vcmask 523264
    %1559 = vst.msk [vmem:[#allocation9] sm:$0xff] %vm1558, %v1557
    // Predicated region
    $region34: #{tpu_custom_call.1} parent=1 // pred_check
      _
    $region35: #{tpu_custom_call.1} parent=1 // pred_check_branch
      %1561 = sbr.rel (0) target = $region37
    $region36: #{tpu_custom_call.1} parent=1 // pred_region
      %s1563 = ssub.s32 128, 128
      %1564 = vsyncadd [#allocation5], %s1563
      %s1566 = sshll.u32 [#allocation9], 4
      %s1567 = int_to_ptr.vmem [resolvable:$true] %s1566
      %1569 = dma.vmem_to_hbm [thread:$0]  %s1567, 128, %s5, [#allocation5]
    $region37: #{tpu_custom_call.1} parent=1 // pred_fallthru
      _
    // Predicated region
    $region38: #{tpu_custom_call.1} parent=1 // pred_check
      _
    $region39: #{tpu_custom_call.1} parent=1 // pred_check_branch
      %1571 = sbr.rel (0) target = $region41
    $region40: #{tpu_custom_call.1} parent=1 // pred_region
      %1572 = dma.done [#allocation5], 128
    $region41: #{tpu_custom_call.1} parent=1 // pred_fallthru
      _
    %1573 = vsyncpa [#allocation4], 1
    %1574 = vsyncpa [#allocation7], 1
    %1575 = vsyncpa [#allocation5], 1

</llo_original>
